<compile_context>
chip_gen: v7x
topology: tpu7x:2x2x1
jax: 0.10.0
libtpu: 0.0.40
codegen_flags: <defaults>
</compile_context>

<pallas_src>
import functools

import jax
import jax.numpy as jnp
from jax.experimental import pallas as pl
from jax.experimental.pallas import tpu as pltpu

EPS = 1e-5
H1, H2 = 256, 128


def _round_up(x, m):
    return ((x + m - 1) // m) * m


def critic_kernel(x_ref, w1_ref, b1_ref, w2_ref, b2_ref, w3_ref, b3_ref,
                  out_ref,
                  s1, q1, s2, q2, rs1_sc, b2f, w3f, b3f, h1_st, h2_st,
                  *, batch, tile_b, stash, has_pad):
    p = pl.program_id(0)          # 0: layer1 + BN1 stats, 1: layer2 + BN2 stats, 2: output
    t = pl.program_id(1)          # batch tile
    inv_b = 1.0 / batch           # static
    row0 = pl.multiple_of(t * tile_b, tile_b)
    bf16 = jnp.bfloat16

    def stat_mask(h):
        # Zero zero-padded rows out of the BN statistics (only the last tile can pad).
        if not has_pad:
            return h
        rows = jax.lax.broadcasted_iota(jnp.int32, (tile_b, 1), 0) + t * tile_b
        return jnp.where(rows < batch, h, 0.0)

    def layer1():
        h1 = jnp.dot(x_ref[...], w1_ref[...], preferred_element_type=jnp.float32)
        return jnp.maximum(h1 + b1_ref[...], 0.0)

    def layer2(h1_f32):
        # BN1 folded: h1n @ W2 + b2 == (h1 * rs1) @ W2 + (b2 - (m1 * rs1) @ W2)
        h1s = (h1_f32 * rs1_sc[...]).astype(bf16)
        h2 = jnp.dot(h1s, w2_ref[...], preferred_element_type=jnp.float32)
        return jnp.maximum(h2 + b2f[...], 0.0)

    # ---- pass 0: layer 1, stash h1, accumulate BN1 sum / sum-of-squares ------------
    @pl.when(p == 0)
    def _pass0():
        @pl.when(t == 0)
        def _init():
            s1[...] = jnp.zeros_like(s1)
            q1[...] = jnp.zeros_like(q1)

        h1 = layer1()
        if stash:
            h1_st[pl.ds(row0, tile_b), :] = h1
        h1m = stat_mask(h1)
        s1[...] += jnp.sum(h1m, axis=0, keepdims=True)
        q1[...] += jnp.sum(h1m * h1m, axis=0, keepdims=True)

    # ---- pass 1: fold BN1, layer 2, stash h2, accumulate BN2 stats ------------------
    @pl.when(p == 1)
    def _pass1():
        @pl.when(t == 0)
        def _fold_bn1():
            m1 = s1[...] * inv_b
            v1 = jnp.maximum(q1[...] * inv_b - m1 * m1, 0.0)   # biased batch variance
            rs1 = jax.lax.rsqrt(v1 + EPS)
            rs1_sc[...] = rs1
            # b2' = b2 - (m1 * rs1) @ W2  (broadcast to 8 rows to keep the MXU happy).
            mrs = jnp.broadcast_to((m1 * rs1).astype(bf16), (8, H1))
            corr = jnp.dot(mrs, w2_ref[...], preferred_element_type=jnp.float32)[0:1, :]
            b2f[...] = b2_ref[...] - corr
            s2[...] = jnp.zeros_like(s2)
            q2[...] = jnp.zeros_like(q2)

        h1 = h1_st[pl.ds(row0, tile_b), :] if stash else layer1()
        h2 = layer2(h1)
        if stash:
            h2_st[pl.ds(row0, tile_b), :] = h2
        h2m = stat_mask(h2)
        s2[...] += jnp.sum(h2m, axis=0, keepdims=True)
        q2[...] += jnp.sum(h2m * h2m, axis=0, keepdims=True)

    # ---- pass 2: fold BN2 into w3/b3, final projection, store -----------------------
    @pl.when(p == 2)
    def _pass2():
        @pl.when(t == 0)
        def _fold_bn2():
            m2 = s2[...] * inv_b
            v2 = jnp.maximum(q2[...] * inv_b - m2 * m2, 0.0)
            rs2 = jax.lax.rsqrt(v2 + EPS)
            # q = h2n @ w3.T + b3 == h2 @ (rs2 * w3).T + (b3 - sum(m2 * rs2 * w3))
            w3f[...] = w3_ref[...] * rs2
            b3f[...] = b3_ref[...] - jnp.sum(m2 * rs2 * w3_ref[...], axis=-1,
                                             keepdims=True)

        h2 = h2_st[pl.ds(row0, tile_b), :] if stash else layer2(layer1())
        # Final Linear(128, 1): VPU multiply + XLU lane reduce (avoid an N=1 MXU pass).
        q = jnp.sum(h2 * w3f[...], axis=-1, keepdims=True) + b3f[...]
        out_ref[...] = q.astype(out_ref.dtype)


def critic_forward(state, action, params, *, tile_b=1024,
                   stash_vmem_cap_bytes=36 * 1024 * 1024):
    """Fused Critic forward.  Matches the torch module at construction time
    (training-mode BatchNorm1d, gamma=1, beta=0, eps=1e-5, biased variance)."""
    B = state.shape[0]
    w1, b1, w2, b2, w3, b3 = params
    d_in = w1.shape[0]

    # Concatenate once in the wrapper (trivial (B, d_in) copy) so layer 1 is a single
    # MXU dot instead of two K-padded passes.
    x = jnp.concatenate([state, action], axis=-1)

    # Batch tiling: multiple of 8 sublanes, 1024-row default (grid-step overhead
    # dominates this tiny model, so bigger tiles win).
    tb = _round_up(min(tile_b, _round_up(B, 8)), 8)
    nt = pl.cdiv(B, tb)
    b_pad = nt * tb
    has_pad = b_pad != B
    if has_pad:
        x = jnp.pad(x, ((0, b_pad - B), (0, 0)))

    # bf16 MXU operands; f32 accumulation / BN statistics stay inside the kernel.
    x = x.astype(jnp.bfloat16)
    w1b = w1.astype(jnp.bfloat16)
    w2b = w2.astype(jnp.bfloat16)

    # Whole-batch activation stash (h1 + h2 = 1.5 KiB/row f32): removes 2 of the 3
    # input re-reads and ~60% of the matmul/ReLU work.  Default cap keeps total VMEM
    # well under v7x's 64 MiB (v5e/v6e have 128 MiB); larger batches recompute instead.
    stash_bytes = b_pad * (H1 * 4 + H2 * 4)
    stash = stash_bytes <= stash_vmem_cap_bytes
    stash_rows = b_pad if stash else 8
    vmem_limit = max(32 * 1024 * 1024, stash_bytes + 8 * 1024 * 1024)

    const = lambda p, t: (0, 0)
    if stash:
        # x is only consumed on pass 0; park the index afterwards so passes 1/2 do not
        # re-read the input from HBM.
        x_map = lambda p, t: (jnp.where(p == 0, t, 0), 0)
    else:
        x_map = lambda p, t: (t, 0)
    # The output is only written on pass 2; parking the index on passes 0/1 means each
    # (tb, 1) tile is flushed to HBM exactly once, with real data.
    out_map = lambda p, t: (jnp.where(p == 2, t, 0), 0)

    kernel = functools.partial(critic_kernel, batch=B, tile_b=tb,
                               stash=stash, has_pad=has_pad)

    out = pl.pallas_call(
        kernel,
        out_shape=jax.ShapeDtypeStruct((b_pad, 1), jnp.float32),
        grid_spec=pltpu.PrefetchScalarGridSpec(
            num_scalar_prefetch=0,
            grid=(3, nt),                      # (pass, batch tile) — tile axis fastest
            in_specs=[
                pl.BlockSpec((tb, d_in), x_map),
                pl.BlockSpec((d_in, H1), const),   # weights/biases stay VMEM-resident
                pl.BlockSpec((1, H1), const),
                pl.BlockSpec((H1, H2), const),
                pl.BlockSpec((1, H2), const),
                pl.BlockSpec((1, H2), const),
                pl.BlockSpec((1, 1), const),
            ],
            out_specs=pl.BlockSpec((tb, 1), out_map),
            scratch_shapes=[
                pltpu.VMEM((1, H1), jnp.float32),           # sum(h1)
                pltpu.VMEM((1, H1), jnp.float32),           # sum(h1^2)
                pltpu.VMEM((1, H2), jnp.float32),           # sum(h2)
                pltpu.VMEM((1, H2), jnp.float32),           # sum(h2^2)
                pltpu.VMEM((1, H1), jnp.float32),           # rs1 = 1/sqrt(var1+eps)
                pltpu.VMEM((1, H2), jnp.float32),           # b2' (BN1 mean folded in)
                pltpu.VMEM((1, H2), jnp.float32),           # w3' (BN2 folded in)
                pltpu.VMEM((1, 1), jnp.float32),            # b3'
                pltpu.VMEM((stash_rows, H1), jnp.float32),  # h1 stash (whole batch)
                pltpu.VMEM((stash_rows, H2), jnp.float32),  # h2 stash (whole batch)
            ],
        ),
        compiler_params=pltpu.CompilerParams(
            # Both axes must be sequential: BN/fold accumulators in scratch couple
            # every batch tile and every pass.
            # TODO(synk): v7x — split the batch across the 2 TensorCores (core_map +
            #             shared partial sums + core_barrier) to use the whole chip.
            dimension_semantics=("arbitrary", "arbitrary"),
            vmem_limit_bytes=vmem_limit,
        ),
    )(x, w1b, b1, w2b, b2, w3, b3)

    return out[:B]


def _trunc_normal(key, shape, std):
    # torch.nn.init.trunc_normal_(mean=0, std=std, a=-2, b=2): absolute cutoff at +/-2.
    return std * jax.random.truncated_normal(key, -2.0 / std, 2.0 / std, shape, jnp.float32)


def init_critic_params(key, state_dim, action_dim):
    d_in = state_dim + action_dim
    k1, k2, k3, kb1, kb2, kb3 = jax.random.split(key, 6)
    # Weights stored as (in_features, out_features) (= W.T of the torch layer).
    w1 = _trunc_normal(k1, (d_in, H1), (2.0 / d_in) ** 0.5)
    w2 = _trunc_normal(k2, (H1, H2), (2.0 / H1) ** 0.5)
    w3 = _trunc_normal(k3, (1, H2), (2.0 / H2) ** 0.5)      # final weights as a row
    # Biases: PyTorch Linear default uniform(-1/sqrt(fan_in), 1/sqrt(fan_in)); kept 2-D.
    b1 = jax.random.uniform(kb1, (1, H1), jnp.float32, -d_in ** -0.5, d_in ** -0.5)
    b2 = jax.random.uniform(kb2, (1, H2), jnp.float32, -H1 ** -0.5, H1 ** -0.5)
    b3 = jax.random.uniform(kb3, (1, 1), jnp.float32, -H2 ** -0.5, H2 ** -0.5)
    return (w1, b1, w2, b2, w3, b3)


def reference_forward(state, action, params):
    """Pure-f32 reference with the module's semantics (training-mode BN, biased var)."""
    w1, b1, w2, b2, w3, b3 = params
    x = jnp.concatenate([state, action], axis=-1)

    def bn(h):
        m = jnp.mean(h, axis=0, keepdims=True)
        v = jnp.mean((h - m) ** 2, axis=0, keepdims=True)
        return (h - m) / jnp.sqrt(v + EPS)

    h = bn(jnp.maximum(x @ w1 + b1, 0.0))
    h = bn(jnp.maximum(h @ w2 + b2, 0.0))
    return h @ w3.T + b3


def reference_forward_mixed(state, action, params):
    """Mirrors the kernel's arithmetic (bf16 MXU operands, BN folded into the following
    layer) — used as a tight numerical check of the kernel itself."""
    w1, b1, w2, b2, w3, b3 = params
    bf = jnp.bfloat16
    x = jnp.concatenate([state, action], axis=-1).astype(bf)
    w1b, w2b = w1.astype(bf), w2.astype(bf)

    h1 = jnp.maximum(jnp.dot(x, w1b, preferred_element_type=jnp.float32) + b1, 0.0)
    m1 = jnp.mean(h1, axis=0, keepdims=True)
    v1 = jnp.maximum(jnp.mean(h1 * h1, axis=0, keepdims=True) - m1 * m1, 0.0)
    rs1 = jax.lax.rsqrt(v1 + EPS)
    h1s = (h1 * rs1).astype(bf)
    b2f = b2 - jnp.dot((m1 * rs1).astype(bf), w2b, preferred_element_type=jnp.float32)
    h2 = jnp.maximum(jnp.dot(h1s, w2b, preferred_element_type=jnp.float32) + b2f, 0.0)
    m2 = jnp.mean(h2, axis=0, keepdims=True)
    v2 = jnp.maximum(jnp.mean(h2 * h2, axis=0, keepdims=True) - m2 * m2, 0.0)
    rs2 = jax.lax.rsqrt(v2 + EPS)
    return jnp.sum(h2 * (w3 * rs2), axis=-1, keepdims=True) + (
        b3 - jnp.sum(m2 * rs2 * w3, axis=-1, keepdims=True))


if __name__ == "__main__":
    state_dim, action_dim = 16, 8
    key = jax.random.PRNGKey(0)
    k_params, k_data = jax.random.split(key)
    params = init_critic_params(k_params, state_dim, action_dim)

    def check(B, **kwargs):
        ks, ka = jax.random.split(jax.random.fold_in(k_data, B))
        state = jax.random.normal(ks, (B, state_dim), jnp.float32)
        action = jax.random.normal(ka, (B, action_dim), jnp.float32)
        q = jax.block_until_ready(critic_forward(state, action, params, **kwargs))
        assert q.shape == (B, 1), q.shape
        # Tight check against a reference mirroring the kernel's exact arithmetic.
        q_mix = reference_forward_mixed(state, action, params)
        err_mix = float(jnp.max(jnp.abs(q - q_mix)))
        assert jnp.allclose(q, q_mix, atol=5e-3, rtol=5e-3), (B, err_mix)
        # Loose check against the f32 module semantics (bf16 MXU operands cost ~1e-2).
        q_f32 = reference_forward(state, action, params)
        err_f32 = float(jnp.max(jnp.abs(q - q_f32)))
        assert jnp.allclose(q, q_f32, atol=5e-2, rtol=5e-2), (B, err_f32)

    check(8)                                      # single tile, no padding, stash path
    check(20, tile_b=8)                           # 3 tiles + padded last tile, stash path
    check(20, tile_b=8, stash_vmem_cap_bytes=0)   # recompute-fallback path
    check(1000)                                   # default tiling, larger batch

    print("KERNEL_OK")
</pallas_src>

<mosaic_0001>
module attributes {stable_mosaic.version = 11 : i64} {
  func.func @critic_kernel(%arg0: i32, %arg1: i32, %arg2: memref<8x24xbf16, #tpu.memory_space<vmem>>, %arg3: memref<24x256xbf16, #tpu.memory_space<vmem>>, %arg4: memref<1x256xf32, #tpu.memory_space<vmem>>, %arg5: memref<256x128xbf16, #tpu.memory_space<vmem>>, %arg6: memref<1x128xf32, #tpu.memory_space<vmem>>, %arg7: memref<1x128xf32, #tpu.memory_space<vmem>>, %arg8: memref<1x1xf32, #tpu.memory_space<vmem>>, %arg9: memref<8x1xf32, #tpu.memory_space<vmem>>, %arg10: memref<1x256xf32, #tpu.memory_space<vmem>>, %arg11: memref<1x256xf32, #tpu.memory_space<vmem>>, %arg12: memref<1x128xf32, #tpu.memory_space<vmem>>, %arg13: memref<1x128xf32, #tpu.memory_space<vmem>>, %arg14: memref<1x256xf32, #tpu.memory_space<vmem>>, %arg15: memref<1x128xf32, #tpu.memory_space<vmem>>, %arg16: memref<1x128xf32, #tpu.memory_space<vmem>>, %arg17: memref<1x1xf32, #tpu.memory_space<vmem>>, %arg18: memref<8x256xf32, #tpu.memory_space<vmem>>, %arg19: memref<8x128xf32, #tpu.memory_space<vmem>>) attributes {dimension_semantics = [#tpu.dimension_semantics<arbitrary>, #tpu.dimension_semantics<arbitrary>], iteration_bounds = array<i64: 3, 1>, scalar_prefetch = 0 : i64, scratch_operands = 10 : i64, tpu.core_type = #tpu.core_type<tc>, window_params = [{transform_indices = @transform_0, window_bounds = array<i64: 8, 24>}, {pipeline_mode = #tpu.pipeline_mode<synchronous>, transform_indices = @transform_1, window_bounds = array<i64: 24, 256>}, {pipeline_mode = #tpu.pipeline_mode<synchronous>, transform_indices = @transform_2, window_bounds = array<i64: 1, 256>}, {pipeline_mode = #tpu.pipeline_mode<synchronous>, transform_indices = @transform_3, window_bounds = array<i64: 256, 128>}, {pipeline_mode = #tpu.pipeline_mode<synchronous>, transform_indices = @transform_4, window_bounds = array<i64: 1, 128>}, {pipeline_mode = #tpu.pipeline_mode<synchronous>, transform_indices = @transform_5, window_bounds = array<i64: 1, 128>}, {pipeline_mode = #tpu.pipeline_mode<synchronous>, transform_indices = @transform_6, window_bounds = array<i64: 1, 1>}, {transform_indices = @transform_7, window_bounds = array<i64: 8, 1>}]} {
    %c8_i32 = arith.constant 8 : i32
    %0 = arith.muli %arg1, %c8_i32 : i32
    %1 = tpu.assume_multiple %0, 8 : i32
    %c0_i32 = arith.constant 0 : i32
    %2 = arith.cmpi eq, %arg0, %c0_i32 : i32
    %3 = arith.extui %2 : i1 to i32
    %c0_i32_0 = arith.constant 0 : i32
    %4 = arith.cmpi ne, %3, %c0_i32_0 : i32
    scf.if %4 {
      %c0_i32_3 = arith.constant 0 : i32
      %11 = arith.cmpi eq, %arg1, %c0_i32_3 : i32
      %12 = arith.extui %11 : i1 to i32
      %c0_i32_4 = arith.constant 0 : i32
      %13 = arith.cmpi ne, %12, %c0_i32_4 : i32
      scf.if %13 {
        %cst_22 = arith.constant 0.000000e+00 : f32
        %35 = vector.broadcast %cst_22 : f32 to vector<1x256xf32>
        %c0_23 = arith.constant 0 : index
        %c0_24 = arith.constant 0 : index
        %36 = vector.load %arg10[%c0_23, %c0_24] : memref<1x256xf32, #tpu.memory_space<vmem>>, vector<1x256xf32>
        tpu.vector_store %arg10[%c0_23, %c0_24], %35 {strides = array<i32>} : memref<1x256xf32, #tpu.memory_space<vmem>>, vector<1x256xf32>,
        %cst_25 = arith.constant 0.000000e+00 : f32
        %37 = vector.broadcast %cst_25 : f32 to vector<1x256xf32>
        %c0_26 = arith.constant 0 : index
        %c0_27 = arith.constant 0 : index
        %38 = vector.load %arg11[%c0_26, %c0_27] : memref<1x256xf32, #tpu.memory_space<vmem>>, vector<1x256xf32>
        tpu.vector_store %arg11[%c0_26, %c0_27], %37 {strides = array<i32>} : memref<1x256xf32, #tpu.memory_space<vmem>>, vector<1x256xf32>,
      } else {
      }
      %c0 = arith.constant 0 : index
      %c0_5 = arith.constant 0 : index
      %14 = vector.load %arg2[%c0, %c0_5] : memref<8x24xbf16, #tpu.memory_space<vmem>>, vector<8x24xbf16>
      %c0_6 = arith.constant 0 : index
      %c0_7 = arith.constant 0 : index
      %15 = vector.load %arg3[%c0_6, %c0_7] : memref<24x256xbf16, #tpu.memory_space<vmem>>, vector<24x256xbf16>
      %cst = arith.constant dense<0.000000e+00> : vector<8x256xf32>
      %16 = tpu.matmul %14, %15, %cst {dimension_numbers = #tpu.dot_dimension_numbers<[1], [0], [0], [1], [0, 0, 1, 1], [], []>} : vector<8x24xbf16>, vector<24x256xbf16>, vector<8x256xf32> -> vector<8x256xf32>
      %c0_8 = arith.constant 0 : index
      %c0_9 = arith.constant 0 : index
      %17 = vector.load %arg4[%c0_8, %c0_9] : memref<1x256xf32, #tpu.memory_space<vmem>>, vector<1x256xf32>
      %18 = vector.broadcast %17 : vector<1x256xf32> to vector<8x256xf32>
      %19 = arith.addf %16, %18 : vector<8x256xf32>
      %cst_10 = arith.constant 0.000000e+00 : f32
      %20 = vector.broadcast %cst_10 : f32 to vector<8x256xf32>
      %21 = arith.maximumf %19, %20 : vector<8x256xf32>
      %22 = arith.index_cast %1 : i32 to index
      %c0_11 = arith.constant 0 : index
      %23 = vector.load %arg18[%22, %c0_11] : memref<8x256xf32, #tpu.memory_space<vmem>>, vector<8x256xf32>
      tpu.vector_store %arg18[%22, %c0_11], %21 {strides = array<i32>} : memref<8x256xf32, #tpu.memory_space<vmem>>, vector<8x256xf32>,
      %c0_12 = arith.constant 0 : index
      %c0_13 = arith.constant 0 : index
      %24 = vector.load %arg10[%c0_12, %c0_13] : memref<1x256xf32, #tpu.memory_space<vmem>>, vector<1x256xf32>
      %cst_14 = arith.constant dense<0.000000e+00> : vector<256xf32>
      %25 = vector.multi_reduction <add>, %21, %cst_14 [0] : vector<8x256xf32> to vector<256xf32>
      %26 = vector.shape_cast %25 : vector<256xf32> to vector<1x256xf32>
      %27 = arith.addf %24, %26 : vector<1x256xf32>
      %c0_15 = arith.constant 0 : index
      %c0_16 = arith.constant 0 : index
      %28 = vector.load %arg10[%c0_15, %c0_16] : memref<1x256xf32, #tpu.memory_space<vmem>>, vector<1x256xf32>
      tpu.vector_store %arg10[%c0_15, %c0_16], %27 {strides = array<i32>} : memref<1x256xf32, #tpu.memory_space<vmem>>, vector<1x256xf32>,
      %c0_17 = arith.constant 0 : index
      %c0_18 = arith.constant 0 : index
      %29 = vector.load %arg11[%c0_17, %c0_18] : memref<1x256xf32, #tpu.memory_space<vmem>>, vector<1x256xf32>
      %30 = arith.mulf %21, %21 : vector<8x256xf32>
      %cst_19 = arith.constant dense<0.000000e+00> : vector<256xf32>
      %31 = vector.multi_reduction <add>, %30, %cst_19 [0] : vector<8x256xf32> to vector<256xf32>
      %32 = vector.shape_cast %31 : vector<256xf32> to vector<1x256xf32>
      %33 = arith.addf %29, %32 : vector<1x256xf32>
      %c0_20 = arith.constant 0 : index
      %c0_21 = arith.constant 0 : index
      %34 = vector.load %arg11[%c0_20, %c0_21] : memref<1x256xf32, #tpu.memory_space<vmem>>, vector<1x256xf32>
      tpu.vector_store %arg11[%c0_20, %c0_21], %33 {strides = array<i32>} : memref<1x256xf32, #tpu.memory_space<vmem>>, vector<1x256xf32>,
    } else {
    }
    %c1_i32 = arith.constant 1 : i32
    %5 = arith.cmpi eq, %arg0, %c1_i32 : i32
    %6 = arith.extui %5 : i1 to i32
    %c0_i32_1 = arith.constant 0 : i32
    %7 = arith.cmpi ne, %6, %c0_i32_1 : i32
    scf.if %7 {
      %c0_i32_3 = arith.constant 0 : i32
      %11 = arith.cmpi eq, %arg1, %c0_i32_3 : i32
      %12 = arith.extui %11 : i1 to i32
      %c0_i32_4 = arith.constant 0 : i32
      %13 = arith.cmpi ne, %12, %c0_i32_4 : i32
      scf.if %13 {
        %c0_23 = arith.constant 0 : index
        %c0_24 = arith.constant 0 : index
        %40 = vector.load %arg10[%c0_23, %c0_24] : memref<1x256xf32, #tpu.memory_space<vmem>>, vector<1x256xf32>
        %cst_25 = arith.constant 1.250000e-01 : f32
        %41 = vector.broadcast %cst_25 : f32 to vector<1x256xf32>
        %42 = arith.mulf %40, %41 : vector<1x256xf32>
        %c0_26 = arith.constant 0 : index
        %c0_27 = arith.constant 0 : index
        %43 = vector.load %arg11[%c0_26, %c0_27] : memref<1x256xf32, #tpu.memory_space<vmem>>, vector<1x256xf32>
        %cst_28 = arith.constant 1.250000e-01 : f32
        %44 = vector.broadcast %cst_28 : f32 to vector<1x256xf32>
        %45 = arith.mulf %43, %44 : vector<1x256xf32>
        %46 = arith.mulf %42, %42 : vector<1x256xf32>
        %47 = arith.subf %45, %46 : vector<1x256xf32>
        %cst_29 = arith.constant 0.000000e+00 : f32
        %48 = vector.broadcast %cst_29 : f32 to vector<1x256xf32>
        %49 = arith.maximumf %47, %48 : vector<1x256xf32>
        %cst_30 = arith.constant 9.99999974E-6 : f32
        %50 = vector.broadcast %cst_30 : f32 to vector<1x256xf32>
        %51 = arith.addf %49, %50 : vector<1x256xf32>
        %52 = math.rsqrt %51 : vector<1x256xf32>
        %c0_31 = arith.constant 0 : index
        %c0_32 = arith.constant 0 : index
        %53 = vector.load %arg14[%c0_31, %c0_32] : memref<1x256xf32, #tpu.memory_space<vmem>>, vector<1x256xf32>
        tpu.vector_store %arg14[%c0_31, %c0_32], %52 {strides = array<i32>} : memref<1x256xf32, #tpu.memory_space<vmem>>, vector<1x256xf32>,
        %54 = arith.mulf %42, %52 : vector<1x256xf32>
        %55 = arith.truncf %54 : vector<1x256xf32> to vector<1x256xbf16>
        %56 = vector.shape_cast %55 : vector<1x256xbf16> to vector<1x256xbf16>
        %57 = vector.broadcast %56 : vector<1x256xbf16> to vector<8x256xbf16>
        %c0_33 = arith.constant 0 : index
        %c0_34 = arith.constant 0 : index
        %58 = vector.load %arg5[%c0_33, %c0_34] : memref<256x128xbf16, #tpu.memory_space<vmem>>, vector<256x128xbf16>
        %cst_35 = arith.constant dense<0.000000e+00> : vector<8x128xf32>
        %59 = tpu.matmul %57, %58, %cst_35 {dimension_numbers = #tpu.dot_dimension_numbers<[1], [0], [0], [1], [0, 0, 1, 1], [], []>} : vector<8x256xbf16>, vector<256x128xbf16>, vector<8x128xf32> -> vector<8x128xf32>
        %60 = vector.extract_strided_slice %59 {offsets = [0, 0], sizes = [1, 128], strides = [1, 1]} : vector<8x128xf32> to vector<1x128xf32>
        %c0_36 = arith.constant 0 : index
        %c0_37 = arith.constant 0 : index
        %61 = vector.load %arg6[%c0_36, %c0_37] : memref<1x128xf32, #tpu.memory_space<vmem>>, vector<1x128xf32>
        %62 = arith.subf %61, %60 : vector<1x128xf32>
        %c0_38 = arith.constant 0 : index
        %c0_39 = arith.constant 0 : index
        %63 = vector.load %arg15[%c0_38, %c0_39] : memref<1x128xf32, #tpu.memory_space<vmem>>, vector<1x128xf32>
        tpu.vector_store %arg15[%c0_38, %c0_39], %62 {strides = array<i32>} : memref<1x128xf32, #tpu.memory_space<vmem>>, vector<1x128xf32>,
        %cst_40 = arith.constant 0.000000e+00 : f32
        %64 = vector.broadcast %cst_40 : f32 to vector<1x128xf32>
        %c0_41 = arith.constant 0 : index
        %c0_42 = arith.constant 0 : index
        %65 = vector.load %arg12[%c0_41, %c0_42] : memref<1x128xf32, #tpu.memory_space<vmem>>, vector<1x128xf32>
        tpu.vector_store %arg12[%c0_41, %c0_42], %64 {strides = array<i32>} : memref<1x128xf32, #tpu.memory_space<vmem>>, vector<1x128xf32>,
        %cst_43 = arith.constant 0.000000e+00 : f32
        %66 = vector.broadcast %cst_43 : f32 to vector<1x128xf32>
        %c0_44 = arith.constant 0 : index
        %c0_45 = arith.constant 0 : index
        %67 = vector.load %arg13[%c0_44, %c0_45] : memref<1x128xf32, #tpu.memory_space<vmem>>, vector<1x128xf32>
        tpu.vector_store %arg13[%c0_44, %c0_45], %66 {strides = array<i32>} : memref<1x128xf32, #tpu.memory_space<vmem>>, vector<1x128xf32>,
      } else {
      }
      %14 = arith.index_cast %1 : i32 to index
      %c0 = arith.constant 0 : index
      %15 = vector.load %arg18[%14, %c0] : memref<8x256xf32, #tpu.memory_space<vmem>>, vector<8x256xf32>
      %c0_5 = arith.constant 0 : index
      %c0_6 = arith.constant 0 : index
      %16 = vector.load %arg14[%c0_5, %c0_6] : memref<1x256xf32, #tpu.memory_space<vmem>>, vector<1x256xf32>
      %17 = vector.broadcast %16 : vector<1x256xf32> to vector<8x256xf32>
      %18 = arith.mulf %15, %17 : vector<8x256xf32>
      %19 = arith.truncf %18 : vector<8x256xf32> to vector<8x256xbf16>
      %c0_7 = arith.constant 0 : index
      %c0_8 = arith.constant 0 : index
      %20 = vector.load %arg5[%c0_7, %c0_8] : memref<256x128xbf16, #tpu.memory_space<vmem>>, vector<256x128xbf16>
      %cst = arith.constant dense<0.000000e+00> : vector<8x128xf32>
      %21 = tpu.matmul %19, %20, %cst {dimension_numbers = #tpu.dot_dimension_numbers<[1], [0], [0], [1], [0, 0, 1, 1], [], []>} : vector<8x256xbf16>, vector<256x128xbf16>, vector<8x128xf32> -> vector<8x128xf32>
      %c0_9 = arith.constant 0 : index
      %c0_10 = arith.constant 0 : index
      %22 = vector.load %arg15[%c0_9, %c0_10] : memref<1x128xf32, #tpu.memory_space<vmem>>, vector<1x128xf32>
      %23 = vector.broadcast %22 : vector<1x128xf32> to vector<8x128xf32>
      %24 = arith.addf %21, %23 : vector<8x128xf32>
      %cst_11 = arith.constant 0.000000e+00 : f32
      %25 = vector.broadcast %cst_11 : f32 to vector<8x128xf32>
      %26 = arith.maximumf %24, %25 : vector<8x128xf32>
      %27 = arith.index_cast %1 : i32 to index
      %c0_12 = arith.constant 0 : index
      %28 = vector.load %arg19[%27, %c0_12] : memref<8x128xf32, #tpu.memory_space<vmem>>, vector<8x128xf32>
      tpu.vector_store %arg19[%27, %c0_12], %26 {strides = array<i32>} : memref<8x128xf32, #tpu.memory_space<vmem>>, vector<8x128xf32>,
      %c0_13 = arith.constant 0 : index
      %c0_14 = arith.constant 0 : index
      %29 = vector.load %arg12[%c0_13, %c0_14] : memref<1x128xf32, #tpu.memory_space<vmem>>, vector<1x128xf32>
      %cst_15 = arith.constant dense<0.000000e+00> : vector<128xf32>
      %30 = vector.multi_reduction <add>, %26, %cst_15 [0] : vector<8x128xf32> to vector<128xf32>
      %31 = vector.shape_cast %30 : vector<128xf32> to vector<1x128xf32>
      %32 = arith.addf %29, %31 : vector<1x128xf32>
      %c0_16 = arith.constant 0 : index
      %c0_17 = arith.constant 0 : index
      %33 = vector.load %arg12[%c0_16, %c0_17] : memref<1x128xf32, #tpu.memory_space<vmem>>, vector<1x128xf32>
      tpu.vector_store %arg12[%c0_16, %c0_17], %32 {strides = array<i32>} : memref<1x128xf32, #tpu.memory_space<vmem>>, vector<1x128xf32>,
      %c0_18 = arith.constant 0 : index
      %c0_19 = arith.constant 0 : index
      %34 = vector.load %arg13[%c0_18, %c0_19] : memref<1x128xf32, #tpu.memory_space<vmem>>, vector<1x128xf32>
      %35 = arith.mulf %26, %26 : vector<8x128xf32>
      %cst_20 = arith.constant dense<0.000000e+00> : vector<128xf32>
      %36 = vector.multi_reduction <add>, %35, %cst_20 [0] : vector<8x128xf32> to vector<128xf32>
      %37 = vector.shape_cast %36 : vector<128xf32> to vector<1x128xf32>
      %38 = arith.addf %34, %37 : vector<1x128xf32>
      %c0_21 = arith.constant 0 : index
      %c0_22 = arith.constant 0 : index
      %39 = vector.load %arg13[%c0_21, %c0_22] : memref<1x128xf32, #tpu.memory_space<vmem>>, vector<1x128xf32>
      tpu.vector_store %arg13[%c0_21, %c0_22], %38 {strides = array<i32>} : memref<1x128xf32, #tpu.memory_space<vmem>>, vector<1x128xf32>,
    } else {
    }
    %c2_i32 = arith.constant 2 : i32
    %8 = arith.cmpi eq, %arg0, %c2_i32 : i32
    %9 = arith.extui %8 : i1 to i32
    %c0_i32_2 = arith.constant 0 : i32
    %10 = arith.cmpi ne, %9, %c0_i32_2 : i32
    scf.if %10 {
      %c0_i32_3 = arith.constant 0 : i32
      %11 = arith.cmpi eq, %arg1, %c0_i32_3 : i32
      %12 = arith.extui %11 : i1 to i32
      %c0_i32_4 = arith.constant 0 : i32
      %13 = arith.cmpi ne, %12, %c0_i32_4 : i32
      scf.if %13 {
        %c0_11 = arith.constant 0 : index
        %c0_12 = arith.constant 0 : index
        %25 = vector.load %arg12[%c0_11, %c0_12] : memref<1x128xf32, #tpu.memory_space<vmem>>, vector<1x128xf32>
        %cst_13 = arith.constant 1.250000e-01 : f32
        %26 = vector.broadcast %cst_13 : f32 to vector<1x128xf32>
        %27 = arith.mulf %25, %26 : vector<1x128xf32>
        %c0_14 = arith.constant 0 : index
        %c0_15 = arith.constant 0 : index
        %28 = vector.load %arg13[%c0_14, %c0_15] : memref<1x128xf32, #tpu.memory_space<vmem>>, vector<1x128xf32>
        %cst_16 = arith.constant 1.250000e-01 : f32
        %29 = vector.broadcast %cst_16 : f32 to vector<1x128xf32>
        %30 = arith.mulf %28, %29 : vector<1x128xf32>
        %31 = arith.mulf %27, %27 : vector<1x128xf32>
        %32 = arith.subf %30, %31 : vector<1x128xf32>
        %cst_17 = arith.constant 0.000000e+00 : f32
        %33 = vector.broadcast %cst_17 : f32 to vector<1x128xf32>
        %34 = arith.maximumf %32, %33 : vector<1x128xf32>
        %cst_18 = arith.constant 9.99999974E-6 : f32
        %35 = vector.broadcast %cst_18 : f32 to vector<1x128xf32>
        %36 = arith.addf %34, %35 : vector<1x128xf32>
        %37 = math.rsqrt %36 : vector<1x128xf32>
        %c0_19 = arith.constant 0 : index
        %c0_20 = arith.constant 0 : index
        %38 = vector.load %arg7[%c0_19, %c0_20] : memref<1x128xf32, #tpu.memory_space<vmem>>, vector<1x128xf32>
        %39 = arith.mulf %38, %37 : vector<1x128xf32>
        %c0_21 = arith.constant 0 : index
        %c0_22 = arith.constant 0 : index
        %40 = vector.load %arg16[%c0_21, %c0_22] : memref<1x128xf32, #tpu.memory_space<vmem>>, vector<1x128xf32>
        tpu.vector_store %arg16[%c0_21, %c0_22], %39 {strides = array<i32>} : memref<1x128xf32, #tpu.memory_space<vmem>>, vector<1x128xf32>,
        %c0_23 = arith.constant 0 : index
        %c0_24 = arith.constant 0 : index
        %41 = vector.load %arg8[%c0_23, %c0_24] : memref<1x1xf32, #tpu.memory_space<vmem>>, vector<1x1xf32>
        %42 = arith.mulf %27, %37 : vector<1x128xf32>
        %c0_25 = arith.constant 0 : index
        %c0_26 = arith.constant 0 : index
        %43 = vector.load %arg7[%c0_25, %c0_26] : memref<1x128xf32, #tpu.memory_space<vmem>>, vector<1x128xf32>
        %44 = arith.mulf %42, %43 : vector<1x128xf32>
        %cst_27 = arith.constant dense<0.000000e+00> : vector<1xf32>
        %45 = vector.multi_reduction <add>, %44, %cst_27 [1] : vector<1x128xf32> to vector<1xf32>
        %46 = vector.shape_cast %45 : vector<1xf32> to vector<1x1xf32>
        %47 = arith.subf %41, %46 : vector<1x1xf32>
        %c0_28 = arith.constant 0 : index
        %c0_29 = arith.constant 0 : index
        %48 = vector.load %arg17[%c0_28, %c0_29] : memref<1x1xf32, #tpu.memory_space<vmem>>, vector<1x1xf32>
        tpu.vector_store %arg17[%c0_28, %c0_29], %47 {strides = array<i32>} : memref<1x1xf32, #tpu.memory_space<vmem>>, vector<1x1xf32>,
      } else {
      }
      %14 = arith.index_cast %1 : i32 to index
      %c0 = arith.constant 0 : index
      %15 = vector.load %arg19[%14, %c0] : memref<8x128xf32, #tpu.memory_space<vmem>>, vector<8x128xf32>
      %c0_5 = arith.constant 0 : index
      %c0_6 = arith.constant 0 : index
      %16 = vector.load %arg16[%c0_5, %c0_6] : memref<1x128xf32, #tpu.memory_space<vmem>>, vector<1x128xf32>
      %17 = vector.broadcast %16 : vector<1x128xf32> to vector<8x128xf32>
      %18 = arith.mulf %15, %17 : vector<8x128xf32>
      %cst = arith.constant dense<0.000000e+00> : vector<8xf32>
      %19 = vector.multi_reduction <add>, %18, %cst [1] : vector<8x128xf32> to vector<8xf32>
      %20 = vector.shape_cast %19 : vector<8xf32> to vector<8x1xf32>
      %c0_7 = arith.constant 0 : index
      %c0_8 = arith.constant 0 : index
      %21 = vector.load %arg17[%c0_7, %c0_8] : memref<1x1xf32, #tpu.memory_space<vmem>>, vector<1x1xf32>
      %22 = vector.broadcast %21 : vector<1x1xf32> to vector<8x1xf32>
      %23 = arith.addf %20, %22 : vector<8x1xf32>
      %c0_9 = arith.constant 0 : index
      %c0_10 = arith.constant 0 : index
      %24 = vector.load %arg9[%c0_9, %c0_10] : memref<8x1xf32, #tpu.memory_space<vmem>>, vector<8x1xf32>
      tpu.vector_store %arg9[%c0_9, %c0_10], %23 {strides = array<i32>} : memref<8x1xf32, #tpu.memory_space<vmem>>, vector<8x1xf32>,
    } else {
    }
    return
  }
  func.func @transform_0(%arg0: i32, %arg1: i32) -> (i32, i32) {
    %c0_i32 = arith.constant 0 : i32
    %0 = arith.cmpi eq, %arg0, %c0_i32 : i32
    %c0_i32_0 = arith.constant 0 : i32
    %1 = arith.select %0, %arg1, %c0_i32_0 : i32
    %c0_i32_1 = arith.constant 0 : i32
    %c0_i32_2 = arith.constant 0 : i32
    return %1, %c0_i32_1 : i32, i32
  }
  func.func @transform_1(%arg0: i32, %arg1: i32) -> (i32, i32) {
    %c0_i32 = arith.constant 0 : i32
    %c0_i32_0 = arith.constant 0 : i32
    %c0_i32_1 = arith.constant 0 : i32
    return %c0_i32, %c0_i32_0 : i32, i32
  }
  func.func @transform_2(%arg0: i32, %arg1: i32) -> (i32, i32) {
    %c0_i32 = arith.constant 0 : i32
    %c0_i32_0 = arith.constant 0 : i32
    %c0_i32_1 = arith.constant 0 : i32
    return %c0_i32, %c0_i32_0 : i32, i32
  }
  func.func @transform_3(%arg0: i32, %arg1: i32) -> (i32, i32) {
    %c0_i32 = arith.constant 0 : i32
    %c0_i32_0 = arith.constant 0 : i32
    %c0_i32_1 = arith.constant 0 : i32
    return %c0_i32, %c0_i32_0 : i32, i32
  }
  func.func @transform_4(%arg0: i32, %arg1: i32) -> (i32, i32) {
    %c0_i32 = arith.constant 0 : i32
    %c0_i32_0 = arith.constant 0 : i32
    %c0_i32_1 = arith.constant 0 : i32
    return %c0_i32, %c0_i32_0 : i32, i32
  }
  func.func @transform_5(%arg0: i32, %arg1: i32) -> (i32, i32) {
    %c0_i32 = arith.constant 0 : i32
    %c0_i32_0 = arith.constant 0 : i32
    %c0_i32_1 = arith.constant 0 : i32
    return %c0_i32, %c0_i32_0 : i32, i32
  }
  func.func @transform_6(%arg0: i32, %arg1: i32) -> (i32, i32) {
    %c0_i32 = arith.constant 0 : i32
    %c0_i32_0 = arith.constant 0 : i32
    %c0_i32_1 = arith.constant 0 : i32
    return %c0_i32, %c0_i32_0 : i32, i32
  }
  func.func @transform_7(%arg0: i32, %arg1: i32) -> (i32, i32) {
    %c2_i32 = arith.constant 2 : i32
    %0 = arith.cmpi eq, %arg0, %c2_i32 : i32
    %c0_i32 = arith.constant 0 : i32
    %1 = arith.select %0, %arg1, %c0_i32 : i32
    %c0_i32_0 = arith.constant 0 : i32
    %c0_i32_1 = arith.constant 0 : i32
    return %1, %c0_i32_0 : i32, i32
  }
}

</mosaic_0001>

<llo_original>
// kernel: tpu_custom_call.1
$region0: #{tpu_custom_call.1}
  #allocation0 [shape = 'u32[]', space=smem, size = 0x4, offset = 0x4, fixed_abs, tag = 'smem constant byte address 0x4 - core index']
  #allocation1 [shape = 'u32[144,128]{1,0:T(1,128)}', space=vmem, size = 0x12000, scoped, tag = 'internal scratch']
  #allocation2 [shape = 'f32[1,256]{1,0:T(1,128)}', space=vmem, size = 0x400, scoped, tag = 'scratch operand']
  #allocation3 [shape = 'f32[1,256]{1,0:T(1,128)}', space=vmem, size = 0x400, scoped, tag = 'scratch operand']
  #allocation4 [shape = 'f32[1,128]{1,0:T(1,128)}', space=vmem, size = 0x200, scoped, tag = 'scratch operand']
  #allocation5 [shape = 'f32[1,128]{1,0:T(1,128)}', space=vmem, size = 0x200, scoped, tag = 'scratch operand']
  #allocation6 [shape = 'f32[1,256]{1,0:T(1,128)}', space=vmem, size = 0x400, scoped, tag = 'scratch operand']
  #allocation7 [shape = 'f32[1,128]{1,0:T(1,128)}', space=vmem, size = 0x200, scoped, tag = 'scratch operand']
  #allocation8 [shape = 'f32[1,128]{1,0:T(1,128)}', space=vmem, size = 0x200, scoped, tag = 'scratch operand']
  #allocation9 [shape = 'f32[1,1]{1,0:T(1,128)}', space=vmem, size = 0x200, scoped, tag = 'scratch operand']
  #allocation10 [shape = 'f32[8,256]{1,0:T(8,128)}', space=vmem, size = 0x2000, scoped, tag = 'scratch operand']
  #allocation11 [shape = 'f32[8,128]{1,0:T(8,128)}', space=vmem, size = 0x1000, scoped, tag = 'scratch operand']
  #allocation12 [shape = 'f32[1,1]{1,0:T(1,128)S(1)}', space=vmem, size = 0x200, scoped, tag = 'scoped memory for tpu_custom_call.1']
  %s0 = inlined_call_operand.hbm [shape: bf16[8,24], index: 0, kind: input, shape index: {}]
  %s1 = inlined_call_operand.hbm [shape: bf16[24,256], index: 1, kind: input, shape index: {}]
  %s2 = inlined_call_operand.vmem [shape: f32[1,256], index: 2, kind: input, shape index: {}]
  %s3 = inlined_call_operand.hbm [shape: bf16[256,128], index: 3, kind: input, shape index: {}]
  %s4 = inlined_call_operand.vmem [shape: f32[1,128], index: 4, kind: input, shape index: {}]
  %s5 = inlined_call_operand.vmem [shape: f32[1,128], index: 5, kind: input, shape index: {}]
  %s6 = inlined_call_operand.<no memory space> [shape: f32[1,1], index: 6, kind: input, shape index: {}]
  %s7 = inlined_call_operand.vmem [shape: f32[8,1], index: 7, kind: output, shape index: {}]
  %s8 = sld [smem:[#allocation0]]
  $region97: #{tpu_custom_call.1} parent=0
    _
  %s10 = ssub.s32 1, %s8
  %s11 = scalar_select 0, %s10, %s8
  %v12 = vstv %s6
  %13 = vst [vmem:[#allocation12] sm:$0x1] %v12
  $region1: #{tpu_custom_call.1} parent=0
    #allocation13 [shape = 'u8[4096]{0}', space=vmem, size = 0x1000, scoped, tag = 'input window, operand 0']
    #allocation14 [shape = 's32[2]{0}', space=sflag, size = 0x8, scoped, tag = 'scoped memory for tpu_custom_call.1']
    #allocation15 [shape = 'u8[12288]{0}', space=vmem, size = 0x3000, scoped, tag = 'input window, operand 1, single buffered']
    #allocation16 [shape = 's32[1]{0}', space=sflag, size = 0x4, scoped, tag = 'scoped memory for tpu_custom_call.1']
    #allocation17 [shape = 'u8[65536]{0}', space=vmem, size = 0x10000, scoped, tag = 'input window, operand 3, single buffered']
    %14 = vsyncpa [#allocation14], 0
    %s15 = scalar_lea.sflag [#allocation14], 1
    %16 = vsyncpa %s15, 0
    %17 = vsyncpa [#allocation16], 0
    loop: start=0, step=1, limit=5
    $region2: #{tpu_custom_call.1} parent=1 // loop_pre_header
      _
    $region3: #{tpu_custom_call.1} parent=1 // loop_header
      %s19 = sphi 0, %s23
      %p20 = scmp.ge.s32.totalorder %s19, 5
      %s26 = sphi 0, %s38
      %s27 = sphi 0, %s34
      %s28 = sphi 0, %s26
      %s29 = sphi 0, %s27
      %s30 = sphi 0, %s28
      %s31 = sphi 0, %s29
      %s45 = sphi 0, %s47
      %s48 = sphi 0, %s45
      %s49 = sphi 0, %s48
      %s65 = sphi 0, %s49
      %s69 = sphi 0, %s69
      %s71 = sphi 0, %s69
      %s72 = sphi 0, %s71
      %s86 = sphi 0, %s72
      %s90 = sphi 0, %s90
      %s92 = sphi 0, %s90
      %s93 = sphi 0, %s92
      %s107 = sphi 0, %s93
      %s111 = sphi 0, %s111
      %s113 = sphi 0, %s111
      %s114 = sphi 0, %s113
      %s128 = sphi 0, %s114
      %s132 = sphi 0, %s132
      %s134 = sphi 0, %s132
      %s135 = sphi 0, %s134
      %s149 = sphi 0, %s135
      %s153 = sphi 0, %s153
      %s155 = sphi 0, %s153
      %s156 = sphi 0, %s155
      %s170 = sphi 0, %s156
      %s174 = sphi 0, %s174
      %s176 = sphi 0, %s174
      %s177 = sphi 0, %s176
      %s191 = sphi 0, %s177
      %s201 = sphi 0, %s203
      %s204 = sphi 0, %s201
      %s205 = sphi 0, %s204
      %s221 = sphi 0, %s205
    $region4: #{tpu_custom_call.1} parent=1 // loop_header_branch
      %22 = sbr.rel (%p20) target = $region8
    $region5: #{tpu_custom_call.1} parent=1 // loop_body
      %s24 = ssub.s32 %s19, 1
      %s25 = ssub.s32 %s19, 2
      %s32 = sadd.s32 1, %s27
      %p33 = scmp.ge.s32.totalorder %s32, 1
      %s34 = scalar_select %p33, 0, %s32
      %s35 = sadd.s32 1, %s26
      %s36 = scalar_select %p33, %s35, %s26
      %p37 = scmp.ge.s32.totalorder %s36, 3
      %s38 = scalar_select %p37, 0, %s36
      %p39 = scmp.eq.s32.totalorder %s26, 0
      %s40 = scalar_select %p39, %s27, 0
      %p41 = scmp.eq.s32.totalorder %s38, 0
      %s42 = scalar_select %p41, %s34, 0
      %s43 = ssub.s32 %s40, %s42
      %p44 = scmp.eq.s32.totalorder %s43, 0
      %s46 = sadd.s32 %s45, 1
      %s47 = scalar_select %p44, %s45, %s46
      %p50 = pneg %p44
      %p51 = scmp.eq.s32.totalorder %s19, 2
      %p52 = por %p50, %p51
      %p53 = scmp.ne.s32.totalorder %s45, %s48
      %p54 = scmp.eq.s32.totalorder %s19, 0
      %p55 = por %p53, %p54
      %p56 = scmp.ne.s32.totalorder %s45, %s48
      %p57 = scmp.eq.s32.totalorder %s24, 2
      %p58 = por %p56, %p57
      %p59 = scmp.ne.s32.totalorder %s48, %s49
      %p60 = scmp.eq.s32.totalorder %s24, 0
      %p61 = por %p59, %p60
      %p62 = scmp.ne.s32.totalorder %s48, %s49
      %p63 = scmp.eq.s32.totalorder %s25, 2
      %p64 = por %p62, %p63
      %p66 = scmp.ne.s32.totalorder %s49, %s65
      %p67 = scmp.eq.s32.totalorder %s25, 0
      %p68 = por %p66, %p67
      %s70 = sadd.s32 %s69, 1
      %p73 = scmp.eq.s32.totalorder %s19, 2
      %p74 = scmp.ne.s32.totalorder %s69, %s71
      %p75 = scmp.eq.s32.totalorder %s19, 0
      %p76 = por %p74, %p75
      %p77 = scmp.ne.s32.totalorder %s69, %s71
      %p78 = scmp.eq.s32.totalorder %s24, 2
      %p79 = por %p77, %p78
      %p80 = scmp.ne.s32.totalorder %s71, %s72
      %p81 = scmp.eq.s32.totalorder %s24, 0
      %p82 = por %p80, %p81
      %p83 = scmp.ne.s32.totalorder %s71, %s72
      %p84 = scmp.eq.s32.totalorder %s25, 2
      %p85 = por %p83, %p84
      %p87 = scmp.ne.s32.totalorder %s72, %s86
      %p88 = scmp.eq.s32.totalorder %s25, 0
      %p89 = por %p87, %p88
      %s91 = sadd.s32 %s90, 1
      %p94 = scmp.eq.s32.totalorder %s19, 2
      %p95 = scmp.ne.s32.totalorder %s90, %s92
      %p96 = scmp.eq.s32.totalorder %s19, 0
      %p97 = por %p95, %p96
      %p98 = scmp.ne.s32.totalorder %s90, %s92
      %p99 = scmp.eq.s32.totalorder %s24, 2
      %p100 = por %p98, %p99
      %p101 = scmp.ne.s32.totalorder %s92, %s93
      %p102 = scmp.eq.s32.totalorder %s24, 0
      %p103 = por %p101, %p102
      %p104 = scmp.ne.s32.totalorder %s92, %s93
      %p105 = scmp.eq.s32.totalorder %s25, 2
      %p106 = por %p104, %p105
      %p108 = scmp.ne.s32.totalorder %s93, %s107
      %p109 = scmp.eq.s32.totalorder %s25, 0
      %p110 = por %p108, %p109
      %s112 = sadd.s32 %s111, 1
      %p115 = scmp.eq.s32.totalorder %s19, 2
      %p116 = scmp.ne.s32.totalorder %s111, %s113
      %p117 = scmp.eq.s32.totalorder %s19, 0
      %p118 = por %p116, %p117
      %p119 = scmp.ne.s32.totalorder %s111, %s113
      %p120 = scmp.eq.s32.totalorder %s24, 2
      %p121 = por %p119, %p120
      %p122 = scmp.ne.s32.totalorder %s113, %s114
      %p123 = scmp.eq.s32.totalorder %s24, 0
      %p124 = por %p122, %p123
      %p125 = scmp.ne.s32.totalorder %s113, %s114
      %p126 = scmp.eq.s32.totalorder %s25, 2
      %p127 = por %p125, %p126
      %p129 = scmp.ne.s32.totalorder %s114, %s128
      %p130 = scmp.eq.s32.totalorder %s25, 0
      %p131 = por %p129, %p130
      %s133 = sadd.s32 %s132, 1
      %p136 = scmp.eq.s32.totalorder %s19, 2
      %p137 = scmp.ne.s32.totalorder %s132, %s134
      %p138 = scmp.eq.s32.totalorder %s19, 0
      %p139 = por %p137, %p138
      %p140 = scmp.ne.s32.totalorder %s132, %s134
      %p141 = scmp.eq.s32.totalorder %s24, 2
      %p142 = por %p140, %p141
      %p143 = scmp.ne.s32.totalorder %s134, %s135
      %p144 = scmp.eq.s32.totalorder %s24, 0
      %p145 = por %p143, %p144
      %p146 = scmp.ne.s32.totalorder %s134, %s135
      %p147 = scmp.eq.s32.totalorder %s25, 2
      %p148 = por %p146, %p147
      %p150 = scmp.ne.s32.totalorder %s135, %s149
      %p151 = scmp.eq.s32.totalorder %s25, 0
      %p152 = por %p150, %p151
      %s154 = sadd.s32 %s153, 1
      %p157 = scmp.eq.s32.totalorder %s19, 2
      %p158 = scmp.ne.s32.totalorder %s153, %s155
      %p159 = scmp.eq.s32.totalorder %s19, 0
      %p160 = por %p158, %p159
      %p161 = scmp.ne.s32.totalorder %s153, %s155
      %p162 = scmp.eq.s32.totalorder %s24, 2
      %p163 = por %p161, %p162
      %p164 = scmp.ne.s32.totalorder %s155, %s156
      %p165 = scmp.eq.s32.totalorder %s24, 0
      %p166 = por %p164, %p165
      %p167 = scmp.ne.s32.totalorder %s155, %s156
      %p168 = scmp.eq.s32.totalorder %s25, 2
      %p169 = por %p167, %p168
      %p171 = scmp.ne.s32.totalorder %s156, %s170
      %p172 = scmp.eq.s32.totalorder %s25, 0
      %p173 = por %p171, %p172
      %s175 = sadd.s32 %s174, 1
      %p178 = scmp.eq.s32.totalorder %s19, 2
      %p179 = scmp.ne.s32.totalorder %s174, %s176
      %p180 = scmp.eq.s32.totalorder %s19, 0
      %p181 = por %p179, %p180
      %p182 = scmp.ne.s32.totalorder %s174, %s176
      %p183 = scmp.eq.s32.totalorder %s24, 2
      %p184 = por %p182, %p183
      %p185 = scmp.ne.s32.totalorder %s176, %s177
      %p186 = scmp.eq.s32.totalorder %s24, 0
      %p187 = por %p185, %p186
      %p188 = scmp.ne.s32.totalorder %s176, %s177
      %p189 = scmp.eq.s32.totalorder %s25, 2
      %p190 = por %p188, %p189
      %p192 = scmp.ne.s32.totalorder %s177, %s191
      %p193 = scmp.eq.s32.totalorder %s25, 0
      %p194 = por %p192, %p193
      %p195 = scmp.eq.s32.totalorder %s26, 2
      %s196 = scalar_select %p195, %s27, 0
      %p197 = scmp.eq.s32.totalorder %s38, 2
      %s198 = scalar_select %p197, %s34, 0
      %s199 = ssub.s32 %s196, %s198
      %p200 = scmp.eq.s32.totalorder %s199, 0
      %s202 = sadd.s32 %s201, 1
      %s203 = scalar_select %p200, %s201, %s202
      %p206 = pneg %p200
      %p207 = scmp.eq.s32.totalorder %s19, 2
      %p208 = por %p206, %p207
      %p209 = scmp.ne.s32.totalorder %s201, %s204
      %p210 = scmp.eq.s32.totalorder %s19, 0
      %p211 = por %p209, %p210
      %p212 = scmp.ne.s32.totalorder %s201, %s204
      %p213 = scmp.eq.s32.totalorder %s24, 2
      %p214 = por %p212, %p213
      %p215 = scmp.ne.s32.totalorder %s204, %s205
      %p216 = scmp.eq.s32.totalorder %s24, 0
      %p217 = por %p215, %p216
      %p218 = scmp.ne.s32.totalorder %s204, %s205
      %p219 = scmp.eq.s32.totalorder %s25, 2
      %p220 = por %p218, %p219
      %p222 = scmp.ne.s32.totalorder %s205, %s221
      %p223 = scmp.eq.s32.totalorder %s25, 0
      %p224 = por %p222, %p223
      %p225 = scmp.le.s32.totalorder 1, %s19
      %p226 = scmp.lt.s32.totalorder %s19, 4
      %p227 = pnand %p225, %p226
      %p228 = pneg %p227
      // Predicated region
      $region9: #{tpu_custom_call.1} parent=5 // pred_check
        _
      $region10: #{tpu_custom_call.1} parent=5 // pred_check_branch
        %230 = sbr.rel (%p227) target = $region12
      $region11: #{tpu_custom_call.1} parent=5 // pred_region
        %s231 = ssub.s32 %s19, 1
        // Predicated region
        $region13: #{tpu_custom_call.1} parent=11 // pred_check
          %p232 = pneg %p82
        $region14: #{tpu_custom_call.1} parent=11 // pred_check_branch
          %234 = sbr.rel (%p232) target = $region16
        $region15: #{tpu_custom_call.1} parent=11 // pred_region
          %s236 = ssub.s32 384, 384
          %237 = vsyncadd [#allocation16], %s236
          %s238 = sshll.u32 [#allocation15], 4
          %s239 = int_to_ptr.vmem [resolvable:$true] %s238
          %244 = dma.hbm_to_vmem [thread:$0]  %s1, 384, %s239, [#allocation16], 128, 128, 8
        $region16: #{tpu_custom_call.1} parent=11 // pred_fallthru
          _
        // Predicated region
        $region17: #{tpu_custom_call.1} parent=11 // pred_check
          %p245 = pneg %p103
        $region18: #{tpu_custom_call.1} parent=11 // pred_check_branch
          %247 = sbr.rel (%p245) target = $region20
        $region19: #{tpu_custom_call.1} parent=11 // pred_region
          _
        $region20: #{tpu_custom_call.1} parent=11 // pred_fallthru
          _
        // Predicated region
        $region21: #{tpu_custom_call.1} parent=11 // pred_check
          %p248 = pneg %p124
        $region22: #{tpu_custom_call.1} parent=11 // pred_check_branch
          %250 = sbr.rel (%p248) target = $region24
        $region23: #{tpu_custom_call.1} parent=11 // pred_region
          %s252 = ssub.s32 2048, 2048
          %253 = vsyncadd [#allocation16], %s252
          %s254 = sshll.u32 [#allocation17], 4
          %s255 = int_to_ptr.vmem [resolvable:$true] %s254
          %260 = dma.hbm_to_vmem [thread:$0]  %s3, 2048, %s255, [#allocation16], 64, 64, 4
        $region24: #{tpu_custom_call.1} parent=11 // pred_fallthru
          _
        // Predicated region
        $region25: #{tpu_custom_call.1} parent=11 // pred_check
          %p261 = pneg %p145
        $region26: #{tpu_custom_call.1} parent=11 // pred_check_branch
          %263 = sbr.rel (%p261) target = $region28
        $region27: #{tpu_custom_call.1} parent=11 // pred_region
          _
        $region28: #{tpu_custom_call.1} parent=11 // pred_fallthru
          _
        // Predicated region
        $region29: #{tpu_custom_call.1} parent=11 // pred_check
          %p264 = pneg %p166
        $region30: #{tpu_custom_call.1} parent=11 // pred_check_branch
          %266 = sbr.rel (%p264) target = $region32
        $region31: #{tpu_custom_call.1} parent=11 // pred_region
          _
        $region32: #{tpu_custom_call.1} parent=11 // pred_fallthru
          _
        // Predicated region
        $region33: #{tpu_custom_call.1} parent=11 // pred_check
          %p267 = pneg %p187
        $region34: #{tpu_custom_call.1} parent=11 // pred_check_branch
          %269 = sbr.rel (%p267) target = $region36
        $region35: #{tpu_custom_call.1} parent=11 // pred_region
          _
        $region36: #{tpu_custom_call.1} parent=11 // pred_fallthru
          _
      $region12: #{tpu_custom_call.1} parent=5 // pred_fallthru
        _
      %p270 = scmp.lt.s32.totalorder %s19, 3
      // Predicated region
      $region37: #{tpu_custom_call.1} parent=5 // pred_check
        %p271 = pneg %p270
      $region38: #{tpu_custom_call.1} parent=5 // pred_check_branch
        %273 = sbr.rel (%p271) target = $region40
      $region39: #{tpu_custom_call.1} parent=5 // pred_region
        // Predicated region
        $region41: #{tpu_custom_call.1} parent=39 // pred_check
          %p274 = pneg %p55
        $region42: #{tpu_custom_call.1} parent=39 // pred_check_branch
          %276 = sbr.rel (%p274) target = $region44
        $region43: #{tpu_custom_call.1} parent=39 // pred_region
          %s277 = sand.u32 %s45, 1
          %s278 = scalar_lea.sflag [#allocation14], %s277
          %s279 = sand.u32 %s45, 1
          %s280 = smul.addr %s279, 4
          %s281 = scalar_lea.vmem [#allocation13], %s280
          %p282 = scmp.eq.s32.totalorder %s26, 0
          %s283 = scalar_select %p282, %s27, 0
          %s285 = ssub.s32 64, 64
          %286 = vsyncadd %s278, %s285
          %s287 = smul.addr %s283, 64
          %s288 = scalar_lea.hbm %s0, %s287
          %s290 = sshll.u32 %s281, 4
          %s291 = int_to_ptr.vmem [resolvable:$true] %s290
          %293 = dma.hbm_to_vmem [thread:$0]  %s288, 64, %s291, %s278
        $region44: #{tpu_custom_call.1} parent=39 // pred_fallthru
          _
      $region40: #{tpu_custom_call.1} parent=5 // pred_fallthru
        _
      %p294 = scmp.le.s32.totalorder 1, %s19
      %p295 = scmp.lt.s32.totalorder %s19, 4
      %p296 = pnand %p294, %p295
      %p297 = pneg %p296
      // Predicated region
      $region45: #{tpu_custom_call.1} parent=5 // pred_check
        _
      $region46: #{tpu_custom_call.1} parent=5 // pred_check_branch
        %299 = sbr.rel (%p296) target = $region48
      $region47: #{tpu_custom_call.1} parent=5 // pred_region
        %s300 = ssub.s32 %s19, 1
        %s301 = sand.u32 %s48, 1
        %s302 = scalar_lea.sflag [#allocation14], %s301
        %s303 = sand.u32 %s48, 1
        %s304 = smul.addr %s303, 4
        %s305 = scalar_lea.vmem [#allocation13], %s304
        // Predicated region
        $region49: #{tpu_custom_call.1} parent=47 // pred_check
          %p306 = pneg %p61
        $region50: #{tpu_custom_call.1} parent=47 // pred_check_branch
          %308 = sbr.rel (%p306) target = $region52
        $region51: #{tpu_custom_call.1} parent=47 // pred_region
          %309 = dma.done %s302, 64
        $region52: #{tpu_custom_call.1} parent=47 // pred_fallthru
          _
        // Predicated region
        $region53: #{tpu_custom_call.1} parent=47 // pred_check
          %p310 = pneg %p82
        $region54: #{tpu_custom_call.1} parent=47 // pred_check_branch
          %312 = sbr.rel (%p310) target = $region56
        $region55: #{tpu_custom_call.1} parent=47 // pred_region
          %313 = dma.done [#allocation16], 384
        $region56: #{tpu_custom_call.1} parent=47 // pred_fallthru
          _
        // Predicated region
        $region57: #{tpu_custom_call.1} parent=47 // pred_check
          %p314 = pneg %p124
        $region58: #{tpu_custom_call.1} parent=47 // pred_check_branch
          %316 = sbr.rel (%p314) target = $region60
        $region59: #{tpu_custom_call.1} parent=47 // pred_region
          %317 = dma.done [#allocation16], 2048
        $region60: #{tpu_custom_call.1} parent=47 // pred_fallthru
          _
        %s318 = sand.u32 %s48, 1
        %s319 = scalar_lea.sflag [#allocation14], %s318
        %s320 = sand.u32 %s48, 1
        %s321 = smul.addr %s320, 4
        %s322 = scalar_lea.vmem [#allocation13], %s321
        %p323 = pneg %p61
        %p324 = pneg %p58
        %p325 = pneg %p82
        %p326 = pneg %p79
        %p327 = pneg %p103
        %p328 = pneg %p100
        %p329 = pneg %p124
        %p330 = pneg %p121
        %p331 = pneg %p145
        %p332 = pneg %p142
        %p333 = pneg %p166
        %p334 = pneg %p163
        %p335 = pneg %p187
        %p336 = pneg %p184
        %p337 = pneg %p217
        %p338 = pneg %p214
        %p339 = scmp.eq.s32.totalorder %s28, 2
        %s340 = scalar_select %p339, %s29, 0
        %p341 = scmp.lt.s32.totalorder %s340, 0
        %s342 = scalar_select %p341, %s340, 0
        %s343 = smul.addr %s342, 8
        %s344 = scalar_lea.vmem %s7, %s343
        %p345 = scmp.eq.s32.totalorder %s28, 0
        %s346 = scalar_select %p345, %s29, 0
        %p347 = scmp.eq.s32.totalorder %s28, 2
        %s348 = scalar_select %p347, %s29, 0
        %p349 = scmp.lt.s32.totalorder %s348, 0
        %s350 = scalar_select %p349, %s348, 0
        %s351 = smul.addr %s350, 8
        %s352 = scalar_lea.vmem %s7, %s351
        %p353 = scmp.eq.s32.totalorder %s28, 2
        %s354 = scalar_select %p353, %s29, 0
        %s356 = smul.u32 %s29, 8
        %p357 = scmp.eq.s32.totalorder %s28, 0
        // Predicated region
        $region61: #{tpu_custom_call.1} parent=47 // pred_check
          %p358 = pneg %p357
        $region62: #{tpu_custom_call.1} parent=47 // pred_check_branch
          %360 = sbr.rel (%p358) target = $region64
        $region63: #{tpu_custom_call.1} parent=47 // pred_region
          %p361 = scmp.eq.s32.totalorder %s29, 0
          // Predicated region
          $region65: #{tpu_custom_call.1} parent=63 // pred_check
            %p362 = pneg %p361
          $region66: #{tpu_custom_call.1} parent=63 // pred_check_branch
            %364 = sbr.rel (%p362) target = $region68
          $region67: #{tpu_custom_call.1} parent=63 // pred_region
            %v365 = vlaneseq
            %vm366 = vcmp.ge.s32.totalorder %v365, 0
            %vm367 = vcmp.lt.s32.totalorder %v365, 256
            %vm368 = vmand %vm366, %vm367
            %369 = vst.msk [vmem:[#allocation2] sm:$0x3] %vm368, 0.0
            %370 = vst.msk [vmem:[#allocation3] sm:$0x3] %vm368, 0.0
          $region68: #{tpu_custom_call.1} parent=63 // pred_fallthru
            _
          %v371 = vld [vmem:[%s305] sm:$0xf]
          %v372 = vld [vmem:[#allocation15] sm:$0xff]
          %v373 = vld [vmem:[#allocation15 + $0x8] sm:$0xff]
          %v374 = vld [vmem:[#allocation15 + $0x10] sm:$0xff]
          %v375 = vld [vmem:[%s2] sm:$0x3]
          %v377 = vlaneseq
          %v378 = vshrl.u32 %v377, 7
          %v379 = vsub.s32 0, %v378
          %v380 = vrot.slane %v375, %v379
          %v381 = vlaneseq
          %v382 = vshrl.u32 %v381, 7
          %v383 = vsub.s32 1, %v382
          %v384 = vrot.slane %v375, %v383
          %v390 = vunpack.c.l.b16 %v372
          %v391 = vunpack.c.h.b16 %v372
          %v392 = vunpack.c.l.b16 %v373
          %v393 = vunpack.c.h.b16 %v373
          %v394 = vunpack.c.l.b16 %v374
          %v395 = vunpack.c.h.b16 %v374
          %v396 = vpack.c.b16 %v392, %v390
          %v397 = vpack.c.b16 %v393, %v391
          %v398 = vpack.c.b16 %v394, %v394
          %v399 = vpack.c.b16 %v395, %v395
          %vm402 = vcmask 195584
          %v404 = vsel %vm402, %v371, 0
          %vm406 = vcmask 1043456
          %v408 = vsel %vm406, %v398, 0
          %v411 = vsel %vm406, %v399, 0
          %413 = vmatprep.subr.bf16.mxu0 %v397
          %414 = vmatpush1.bf16.msra.mxu0 %v396
          %415 = vmatprep.subr.bf16.mxu0 %v411
          %416 = vmatpush1.bf16.msra.mxu0 %v408
          %417 = vmatprep.subr.bf16.mxu0 0
          %418 = vmatpush1.bf16.msra.mxu0 0
          %419 = vmatprep.subr.bf16.mxu0 0
          %420 = vmatpush1.bf16.msra.mxu0 0
          %421 = vmatprep.subr.bf16.mxu0 0
          %422 = vmatpush1.bf16.msra.mxu0 0
          %423 = vmatprep.subr.bf16.mxu0 0
          %424 = vmatpush1.bf16.msra.mxu0 0
          %425 = vmatprep.subr.bf16.mxu0 0
          %426 = vmatpush1.bf16.msra.mxu0 0
          %427 = vmatprep.subr.bf16.mxu0 0
          %428 = vmatpush1.bf16.msra.mxu0 0
          %429 = vmatprep.subr.bf16.mxu0 0
          %430 = vmatpush1.bf16.msra.mxu0 0
          %431 = vmatprep.subr.bf16.mxu0 0
          %432 = vmatpush1.bf16.msra.mxu0 0
          %433 = vmatprep.subr.bf16.mxu0 0
          %434 = vmatpush1.bf16.msra.mxu0 0
          %435 = vmatprep.subr.bf16.mxu0 0
          %436 = vmatpush1.bf16.msra.mxu0 0
          %437 = vmatprep.subr.bf16.mxu0 0
          %438 = vmatpush1.bf16.msra.mxu0 0
          %439 = vmatprep.subr.bf16.mxu0 0
          %440 = vmatpush1.bf16.msra.mxu0 0
          %441 = vmatprep.subr.bf16.mxu0 0
          %442 = vmatpush1.bf16.msra.mxu0 0
          %443 = vmatprep.subr.bf16.mxu0 0
          %444 = vmatpush1.bf16.msra.mxu0 0
          %445 = vmatprep.mubr.bf16.mxu0 0
          %446 = vmatmul.mubr.bf16.gmra.mrb[0].mxu0 %v404
          %v447 = vpop.f32.mrb[0].mxu0
          %v448 = vadd.f32 %v380, %v447
          %v449 = vpop.f32.mrb[0].mxu0
          %v450 = vadd.f32 %v384, %v449
          %v451 = vpop.f32.mrb[0].mxu0
          %v452 = vpop.f32.mrb[0].mxu0
          %453 = vdwg.mxu0
          %v454 = vmax.f32 %v448, 0.0
          %v455 = vmax.f32 %v450, 0.0
          %s456 = sshra.s32 %s356, 3
          %s457 = sand.u32 %s356, 7
          %s458 = smul.u32 %s456, 2
          %s459 = smul.addr %s458, 8
          %s460 = scalar_lea.vmem [#allocation10], %s459
          %461 = vst [vmem:[%s460] sm:$0xff] %v454
          %462 = vst [vmem:[%s460 + $0x8] sm:$0xff] %v455
          %v463 = vld [vmem:[#allocation2] sm:$0x3]
          %v464 = vrot.slane %v454, 4
          %v465 = vadd.f32 %v454, %v464
          %v466 = vrot.slane %v465, 2
          %v467 = vadd.f32 %v465, %v466
          %v468 = vrot.slane %v467, 1
          %v469 = vadd.f32 %v467, %v468
          %v470 = vrot.slane %v455, 4
          %v471 = vadd.f32 %v455, %v470
          %v472 = vrot.slane %v471, 2
          %v473 = vadd.f32 %v471, %v472
          %v474 = vrot.slane %v473, 1
          %v475 = vadd.f32 %v473, %v474
          %v478 = vcombine.low %v469, %v475
          %v480 = vunpack.c.l.s4 1966171168
          %v481 = vunpack.c.0.s8 %v480
          %v482 = vlaneseq
          %v483 = vshrl.u32 %v482, 7
          %v484 = vsub.s32 %v481, %v483
          %v485 = vrot.slane %v478, %v484
          %v487 = vunpack.c.l.s4 1966171168
          %v488 = vunpack.c.0.s8 %v487
          %v489 = vlaneseq
          %v490 = vshrl.u32 %v489, 7
          %v491 = vsub.s32 %v488, %v490
          %v492 = vrot.slane %v485, %v491
          %v494 = vadd.f32 %v463, %v492
          %v495 = vlaneseq
          %vm496 = vcmp.ge.s32.totalorder %v495, 0
          %vm497 = vcmp.lt.s32.totalorder %v495, 256
          %vm498 = vmand %vm496, %vm497
          %499 = vst.msk [vmem:[#allocation2] sm:$0x3] %vm498, %v494
          %v500 = vld [vmem:[#allocation3] sm:$0x3]
          %v501 = vmul.f32 %v454, %v454
          %v502 = vmul.f32 %v455, %v455
          %v503 = vrot.slane %v501, 4
          %v504 = vadd.f32 %v501, %v503
          %v505 = vrot.slane %v504, 2
          %v506 = vadd.f32 %v504, %v505
          %v507 = vrot.slane %v506, 1
          %v508 = vadd.f32 %v506, %v507
          %v509 = vrot.slane %v502, 4
          %v510 = vadd.f32 %v502, %v509
          %v511 = vrot.slane %v510, 2
          %v512 = vadd.f32 %v510, %v511
          %v513 = vrot.slane %v512, 1
          %v514 = vadd.f32 %v512, %v513
          %v517 = vcombine.low %v508, %v514
          %v519 = vunpack.c.l.s4 1966171168
          %v520 = vunpack.c.0.s8 %v519
          %v521 = vlaneseq
          %v522 = vshrl.u32 %v521, 7
          %v523 = vsub.s32 %v520, %v522
          %v524 = vrot.slane %v517, %v523
          %v526 = vunpack.c.l.s4 1966171168
          %v527 = vunpack.c.0.s8 %v526
          %v528 = vlaneseq
          %v529 = vshrl.u32 %v528, 7
          %v530 = vsub.s32 %v527, %v529
          %v531 = vrot.slane %v524, %v530
          %v533 = vadd.f32 %v500, %v531
          %534 = vst.msk [vmem:[#allocation3] sm:$0x3] %vm498, %v533
        $region64: #{tpu_custom_call.1} parent=47 // pred_fallthru
          _
        %p535 = scmp.eq.s32.totalorder %s28, 1
        // Predicated region
        $region69: #{tpu_custom_call.1} parent=47 // pred_check
          %p536 = pneg %p535
        $region70: #{tpu_custom_call.1} parent=47 // pred_check_branch
          %538 = sbr.rel (%p536) target = $region72
        $region71: #{tpu_custom_call.1} parent=47 // pred_region
          %p539 = scmp.eq.s32.totalorder %s29, 0
          // Predicated region
          $region73: #{tpu_custom_call.1} parent=71 // pred_check
            %p540 = pneg %p539
          $region74: #{tpu_custom_call.1} parent=71 // pred_check_branch
            %542 = sbr.rel (%p540) target = $region76
          $region75: #{tpu_custom_call.1} parent=71 // pred_region
            %v543 = vld [vmem:[#allocation2] sm:$0x3]
            %v544 = vmul.f32 %v543, 0.125
            %v545 = vld [vmem:[#allocation3] sm:$0x3]
            %v546 = vmul.f32 %v545, 0.125
            %v547 = vmul.f32 %v544, %v544
            %v548 = vsub.f32 %v546, %v547
            %v549 = vmax.f32 %v548, 0.0
            %v550 = vadd.f32 %v549, 1e-05
            %v551 = vrsqrt.pop %v550
            %v552 = vlaneseq
            %vm553 = vcmp.ge.s32.totalorder %v552, 0
            %vm554 = vcmp.lt.s32.totalorder %v552, 256
            %vm555 = vmand %vm553, %vm554
            %556 = vst.msk [vmem:[#allocation6] sm:$0x3] %vm555, %v551
            %v557 = vmul.f32 %v544, %v551
            %v559 = vlaneseq
            %v560 = vshrl.u32 %v559, 7
            %v561 = vsub.s32 0, %v560
            %v562 = vrot.slane %v557, %v561
            %v563 = vlaneseq
            %v564 = vshrl.u32 %v563, 7
            %v565 = vsub.s32 1, %v564
            %v566 = vrot.slane %v557, %v565
            %v569 = vpack.c.bf16 %v562, %v562
            %v570 = vpack.c.bf16 %v566, %v566
            %v572 = vpack.i.b16 %v569, %v569
            %v574 = vlaneseq
            %v575 = vshrl.u32 %v574, 7
            %v576 = vsub.s32 0, %v575
            %v577 = vrot.slane %v572, %v576
            %v579 = vpack.i.b16 %v570, %v570
            %v581 = vlaneseq
            %v582 = vshrl.u32 %v581, 7
            %v583 = vsub.s32 0, %v582
            %v584 = vrot.slane %v579, %v583
            %v585 = vld [vmem:[#allocation17] sm:$0xf]
            %v586 = vld [vmem:[#allocation17 + $0x4] sm:$0xf]
            %v587 = vld [vmem:[#allocation17 + $0x8] sm:$0xf]
            %v588 = vld [vmem:[#allocation17 + $0xc] sm:$0xf]
            %v589 = vld [vmem:[#allocation17 + $0x10] sm:$0xf]
            %v590 = vld [vmem:[#allocation17 + $0x14] sm:$0xf]
            %v591 = vld [vmem:[#allocation17 + $0x18] sm:$0xf]
            %v592 = vld [vmem:[#allocation17 + $0x1c] sm:$0xf]
            %v593 = vld [vmem:[#allocation17 + $0x20] sm:$0xf]
            %v594 = vld [vmem:[#allocation17 + $0x24] sm:$0xf]
            %v595 = vld [vmem:[#allocation17 + $0x28] sm:$0xf]
            %v596 = vld [vmem:[#allocation17 + $0x2c] sm:$0xf]
            %v597 = vld [vmem:[#allocation17 + $0x30] sm:$0xf]
            %v598 = vld [vmem:[#allocation17 + $0x34] sm:$0xf]
            %v599 = vld [vmem:[#allocation17 + $0x38] sm:$0xf]
            %v600 = vld [vmem:[#allocation17 + $0x3c] sm:$0xf]
            %v601 = vld [vmem:[#allocation17 + $0x40] sm:$0xf]
            %v602 = vld [vmem:[#allocation17 + $0x44] sm:$0xf]
            %v603 = vld [vmem:[#allocation17 + $0x48] sm:$0xf]
            %v604 = vld [vmem:[#allocation17 + $0x4c] sm:$0xf]
            %v605 = vld [vmem:[#allocation17 + $0x50] sm:$0xf]
            %v606 = vld [vmem:[#allocation17 + $0x54] sm:$0xf]
            %v607 = vld [vmem:[#allocation17 + $0x58] sm:$0xf]
            %v608 = vld [vmem:[#allocation17 + $0x5c] sm:$0xf]
            %v609 = vld [vmem:[#allocation17 + $0x60] sm:$0xf]
            %v610 = vld [vmem:[#allocation17 + $0x64] sm:$0xf]
            %v611 = vld [vmem:[#allocation17 + $0x68] sm:$0xf]
            %v612 = vld [vmem:[#allocation17 + $0x6c] sm:$0xf]
            %v613 = vld [vmem:[#allocation17 + $0x70] sm:$0xf]
            %v614 = vld [vmem:[#allocation17 + $0x74] sm:$0xf]
            %v615 = vld [vmem:[#allocation17 + $0x78] sm:$0xf]
            %v616 = vld [vmem:[#allocation17 + $0x7c] sm:$0xf]
            %v649 = vunpack.c.l.b16 %v585
            %v650 = vunpack.c.l.b16 %v586
            %v651 = vunpack.c.l.b16 %v587
            %v652 = vunpack.c.l.b16 %v588
            %v653 = vunpack.c.l.b16 %v589
            %v654 = vunpack.c.l.b16 %v590
            %v655 = vunpack.c.l.b16 %v591
            %v656 = vunpack.c.l.b16 %v592
            %v657 = vunpack.c.l.b16 %v593
            %v658 = vunpack.c.l.b16 %v594
            %v659 = vunpack.c.l.b16 %v595
            %v660 = vunpack.c.l.b16 %v596
            %v661 = vunpack.c.l.b16 %v597
            %v662 = vunpack.c.l.b16 %v598
            %v663 = vunpack.c.l.b16 %v599
            %v664 = vunpack.c.l.b16 %v600
            %v665 = vunpack.c.l.b16 %v601
            %v666 = vunpack.c.l.b16 %v602
            %v667 = vunpack.c.l.b16 %v603
            %v668 = vunpack.c.l.b16 %v604
            %v669 = vunpack.c.l.b16 %v605
            %v670 = vunpack.c.l.b16 %v606
            %v671 = vunpack.c.l.b16 %v607
            %v672 = vunpack.c.l.b16 %v608
            %v673 = vunpack.c.l.b16 %v609
            %v674 = vunpack.c.l.b16 %v610
            %v675 = vunpack.c.l.b16 %v611
            %v676 = vunpack.c.l.b16 %v612
            %v677 = vunpack.c.l.b16 %v613
            %v678 = vunpack.c.l.b16 %v614
            %v679 = vunpack.c.l.b16 %v615
            %v680 = vunpack.c.l.b16 %v616
            %v681 = vpack.c.b16 %v650, %v649
            %v682 = vpack.c.b16 %v652, %v651
            %v683 = vpack.c.b16 %v654, %v653
            %v684 = vpack.c.b16 %v656, %v655
            %v685 = vpack.c.b16 %v658, %v657
            %v686 = vpack.c.b16 %v660, %v659
            %v687 = vpack.c.b16 %v662, %v661
            %v688 = vpack.c.b16 %v664, %v663
            %v689 = vpack.c.b16 %v666, %v665
            %v690 = vpack.c.b16 %v668, %v667
            %v691 = vpack.c.b16 %v670, %v669
            %v692 = vpack.c.b16 %v672, %v671
            %v693 = vpack.c.b16 %v674, %v673
            %v694 = vpack.c.b16 %v676, %v675
            %v695 = vpack.c.b16 %v678, %v677
            %v696 = vpack.c.b16 %v680, %v679
            %713 = vmatprep.subr.bf16.mxu0 0
            %714 = vmatpush1.bf16.msra.mxu0 %v681
            %715 = vmatprep.subr.bf16.mxu0 0
            %716 = vmatpush1.bf16.msra.mxu0 %v682
            %717 = vmatprep.subr.bf16.mxu0 0
            %718 = vmatpush1.bf16.msra.mxu0 %v683
            %719 = vmatprep.subr.bf16.mxu0 0
            %720 = vmatpush1.bf16.msra.mxu0 %v684
            %721 = vmatprep.subr.bf16.mxu0 0
            %722 = vmatpush1.bf16.msra.mxu0 %v685
            %723 = vmatprep.subr.bf16.mxu0 0
            %724 = vmatpush1.bf16.msra.mxu0 %v686
            %725 = vmatprep.subr.bf16.mxu0 0
            %726 = vmatpush1.bf16.msra.mxu0 %v687
            %727 = vmatprep.subr.bf16.mxu0 0
            %728 = vmatpush1.bf16.msra.mxu0 %v688
            %729 = vmatprep.subr.bf16.mxu0 0
            %730 = vmatpush1.bf16.msra.mxu0 %v689
            %731 = vmatprep.subr.bf16.mxu0 0
            %732 = vmatpush1.bf16.msra.mxu0 %v690
            %733 = vmatprep.subr.bf16.mxu0 0
            %734 = vmatpush1.bf16.msra.mxu0 %v691
            %735 = vmatprep.subr.bf16.mxu0 0
            %736 = vmatpush1.bf16.msra.mxu0 %v692
            %737 = vmatprep.subr.bf16.mxu0 0
            %738 = vmatpush1.bf16.msra.mxu0 %v693
            %739 = vmatprep.subr.bf16.mxu0 0
            %740 = vmatpush1.bf16.msra.mxu0 %v694
            %741 = vmatprep.subr.bf16.mxu0 0
            %742 = vmatpush1.bf16.msra.mxu0 %v695
            %743 = vmatprep.subr.bf16.mxu0 0
            %744 = vmatpush1.bf16.msra.mxu0 %v696
            %745 = vmatprep.mubr.bf16.mxu0 %v584
            %746 = vmatmul.mubr.bf16.gmra.mrb[0].mxu0 %v577
            %v747 = vpop.f32.mrb[0].mxu0
            %v748 = vadd.f32 0.0, %v747
            %v749 = vpop.f32.mrb[0].mxu0
            %v750 = vpop.f32.mrb[0].mxu0
            %v751 = vpop.f32.mrb[0].mxu0
            %752 = vdwg.mxu0
            %v753 = vld [vmem:[%s4] sm:$0x1]
            %v754 = vsub.f32 %v753, %v748
            %755 = vst [vmem:[#allocation7] sm:$0x1] %v754
            %756 = vst [vmem:[#allocation4] sm:$0x1] 0.0
            %757 = vst [vmem:[#allocation5] sm:$0x1] 0.0
          $region76: #{tpu_custom_call.1} parent=71 // pred_fallthru
            _
          %s758 = sshra.s32 %s356, 3
          %s759 = sand.u32 %s356, 7
          %s760 = smul.u32 %s758, 2
          %s761 = smul.addr %s760, 8
          %s762 = scalar_lea.vmem [#allocation10], %s761
          %v763 = vld [vmem:[%s762] sm:$0xff]
          %v764 = vld [vmem:[%s762 + $0x8] sm:$0xff]
          %v765 = vld [vmem:[#allocation6] sm:$0x3]
          %v767 = vlaneseq
          %v768 = vshrl.u32 %v767, 7
          %v769 = vsub.s32 0, %v768
          %v770 = vrot.slane %v765, %v769
          %v771 = vlaneseq
          %v772 = vshrl.u32 %v771, 7
          %v773 = vsub.s32 1, %v772
          %v774 = vrot.slane %v765, %v773
          %v777 = vmul.f32 %v763, %v770
          %v778 = vmul.f32 %v764, %v774
          %v779 = vpack.c.bf16 %v777, %v777
          %v780 = vpack.c.bf16 %v778, %v778
          %v781 = vld [vmem:[#allocation17] sm:$0xf]
          %v782 = vld [vmem:[#allocation17 + $0x4] sm:$0xf]
          %v783 = vld [vmem:[#allocation17 + $0x8] sm:$0xf]
          %v784 = vld [vmem:[#allocation17 + $0xc] sm:$0xf]
          %v785 = vld [vmem:[#allocation17 + $0x10] sm:$0xf]
          %v786 = vld [vmem:[#allocation17 + $0x14] sm:$0xf]
          %v787 = vld [vmem:[#allocation17 + $0x18] sm:$0xf]
          %v788 = vld [vmem:[#allocation17 + $0x1c] sm:$0xf]
          %v789 = vld [vmem:[#allocation17 + $0x20] sm:$0xf]
          %v790 = vld [vmem:[#allocation17 + $0x24] sm:$0xf]
          %v791 = vld [vmem:[#allocation17 + $0x28] sm:$0xf]
          %v792 = vld [vmem:[#allocation17 + $0x2c] sm:$0xf]
          %v793 = vld [vmem:[#allocation17 + $0x30] sm:$0xf]
          %v794 = vld [vmem:[#allocation17 + $0x34] sm:$0xf]
          %v795 = vld [vmem:[#allocation17 + $0x38] sm:$0xf]
          %v796 = vld [vmem:[#allocation17 + $0x3c] sm:$0xf]
          %v797 = vld [vmem:[#allocation17 + $0x40] sm:$0xf]
          %v798 = vld [vmem:[#allocation17 + $0x44] sm:$0xf]
          %v799 = vld [vmem:[#allocation17 + $0x48] sm:$0xf]
          %v800 = vld [vmem:[#allocation17 + $0x4c] sm:$0xf]
          %v801 = vld [vmem:[#allocation17 + $0x50] sm:$0xf]
          %v802 = vld [vmem:[#allocation17 + $0x54] sm:$0xf]
          %v803 = vld [vmem:[#allocation17 + $0x58] sm:$0xf]
          %v804 = vld [vmem:[#allocation17 + $0x5c] sm:$0xf]
          %v805 = vld [vmem:[#allocation17 + $0x60] sm:$0xf]
          %v806 = vld [vmem:[#allocation17 + $0x64] sm:$0xf]
          %v807 = vld [vmem:[#allocation17 + $0x68] sm:$0xf]
          %v808 = vld [vmem:[#allocation17 + $0x6c] sm:$0xf]
          %v809 = vld [vmem:[#allocation17 + $0x70] sm:$0xf]
          %v810 = vld [vmem:[#allocation17 + $0x74] sm:$0xf]
          %v811 = vld [vmem:[#allocation17 + $0x78] sm:$0xf]
          %v812 = vld [vmem:[#allocation17 + $0x7c] sm:$0xf]
          %v813 = vld [vmem:[#allocation7] sm:$0x1]
          %v815 = vlaneseq
          %v816 = vshrl.u32 %v815, 7
          %v817 = vsub.s32 0, %v816
          %v818 = vrot.slane %v813, %v817
          %v852 = vunpack.c.l.b16 %v781
          %v853 = vunpack.c.l.b16 %v782
          %v854 = vunpack.c.l.b16 %v783
          %v855 = vunpack.c.l.b16 %v784
          %v856 = vunpack.c.l.b16 %v785
          %v857 = vunpack.c.l.b16 %v786
          %v858 = vunpack.c.l.b16 %v787
          %v859 = vunpack.c.l.b16 %v788
          %v860 = vunpack.c.l.b16 %v789
          %v861 = vunpack.c.l.b16 %v790
          %v862 = vunpack.c.l.b16 %v791
          %v863 = vunpack.c.l.b16 %v792
          %v864 = vunpack.c.l.b16 %v793
          %v865 = vunpack.c.l.b16 %v794
          %v866 = vunpack.c.l.b16 %v795
          %v867 = vunpack.c.l.b16 %v796
          %v868 = vunpack.c.l.b16 %v797
          %v869 = vunpack.c.l.b16 %v798
          %v870 = vunpack.c.l.b16 %v799
          %v871 = vunpack.c.l.b16 %v800
          %v872 = vunpack.c.l.b16 %v801
          %v873 = vunpack.c.l.b16 %v802
          %v874 = vunpack.c.l.b16 %v803
          %v875 = vunpack.c.l.b16 %v804
          %v876 = vunpack.c.l.b16 %v805
          %v877 = vunpack.c.l.b16 %v806
          %v878 = vunpack.c.l.b16 %v807
          %v879 = vunpack.c.l.b16 %v808
          %v880 = vunpack.c.l.b16 %v809
          %v881 = vunpack.c.l.b16 %v810
          %v882 = vunpack.c.l.b16 %v811
          %v883 = vunpack.c.l.b16 %v812
          %v884 = vpack.c.b16 %v853, %v852
          %v885 = vpack.c.b16 %v855, %v854
          %v886 = vpack.c.b16 %v857, %v856
          %v887 = vpack.c.b16 %v859, %v858
          %v888 = vpack.c.b16 %v861, %v860
          %v889 = vpack.c.b16 %v863, %v862
          %v890 = vpack.c.b16 %v865, %v864
          %v891 = vpack.c.b16 %v867, %v866
          %v892 = vpack.c.b16 %v869, %v868
          %v893 = vpack.c.b16 %v871, %v870
          %v894 = vpack.c.b16 %v873, %v872
          %v895 = vpack.c.b16 %v875, %v874
          %v896 = vpack.c.b16 %v877, %v876
          %v897 = vpack.c.b16 %v879, %v878
          %v898 = vpack.c.b16 %v881, %v880
          %v899 = vpack.c.b16 %v883, %v882
          %916 = vmatprep.subr.bf16.mxu0 0
          %917 = vmatpush1.bf16.msra.mxu0 %v884
          %918 = vmatprep.subr.bf16.mxu0 0
          %919 = vmatpush1.bf16.msra.mxu0 %v885
          %920 = vmatprep.subr.bf16.mxu0 0
          %921 = vmatpush1.bf16.msra.mxu0 %v886
          %922 = vmatprep.subr.bf16.mxu0 0
          %923 = vmatpush1.bf16.msra.mxu0 %v887
          %924 = vmatprep.subr.bf16.mxu0 0
          %925 = vmatpush1.bf16.msra.mxu0 %v888
          %926 = vmatprep.subr.bf16.mxu0 0
          %927 = vmatpush1.bf16.msra.mxu0 %v889
          %928 = vmatprep.subr.bf16.mxu0 0
          %929 = vmatpush1.bf16.msra.mxu0 %v890
          %930 = vmatprep.subr.bf16.mxu0 0
          %931 = vmatpush1.bf16.msra.mxu0 %v891
          %932 = vmatprep.subr.bf16.mxu0 0
          %933 = vmatpush1.bf16.msra.mxu0 %v892
          %934 = vmatprep.subr.bf16.mxu0 0
          %935 = vmatpush1.bf16.msra.mxu0 %v893
          %936 = vmatprep.subr.bf16.mxu0 0
          %937 = vmatpush1.bf16.msra.mxu0 %v894
          %938 = vmatprep.subr.bf16.mxu0 0
          %939 = vmatpush1.bf16.msra.mxu0 %v895
          %940 = vmatprep.subr.bf16.mxu0 0
          %941 = vmatpush1.bf16.msra.mxu0 %v896
          %942 = vmatprep.subr.bf16.mxu0 0
          %943 = vmatpush1.bf16.msra.mxu0 %v897
          %944 = vmatprep.subr.bf16.mxu0 0
          %945 = vmatpush1.bf16.msra.mxu0 %v898
          %946 = vmatprep.subr.bf16.mxu0 0
          %947 = vmatpush1.bf16.msra.mxu0 %v899
          %948 = vmatprep.mubr.bf16.mxu0 %v780
          %949 = vmatmul.mubr.bf16.gmra.mrb[0].mxu0 %v779
          %v950 = vpop.f32.mrb[0].mxu0
          %v951 = vadd.f32 %v818, %v950
          %v952 = vpop.f32.mrb[0].mxu0
          %v953 = vpop.f32.mrb[0].mxu0
          %v954 = vpop.f32.mrb[0].mxu0
          %955 = vdwg.mxu0
          %v956 = vmax.f32 %v951, 0.0
          %s957 = scalar_lea.vmem [#allocation11], %s356
          %958 = vst [vmem:[%s957] sm:$0xff] %v956
          %v959 = vld [vmem:[#allocation4] sm:$0x1]
          %v960 = vrot.slane %v956, 4
          %v961 = vadd.f32 %v956, %v960
          %v962 = vrot.slane %v961, 2
          %v963 = vadd.f32 %v961, %v962
          %v964 = vrot.slane %v963, 1
          %v965 = vadd.f32 %v963, %v964
          %v966 = vadd.f32 %v959, %v965
          %967 = vst [vmem:[#allocation4] sm:$0x1] %v966
          %v968 = vld [vmem:[#allocation5] sm:$0x1]
          %v969 = vmul.f32 %v956, %v956
          %v970 = vrot.slane %v969, 4
          %v971 = vadd.f32 %v969, %v970
          %v972 = vrot.slane %v971, 2
          %v973 = vadd.f32 %v971, %v972
          %v974 = vrot.slane %v973, 1
          %v975 = vadd.f32 %v973, %v974
          %v976 = vadd.f32 %v968, %v975
          %977 = vst [vmem:[#allocation5] sm:$0x1] %v976
        $region72: #{tpu_custom_call.1} parent=47 // pred_fallthru
          _
        %p978 = scmp.eq.s32.totalorder %s28, 2
        // Predicated region
        $region77: #{tpu_custom_call.1} parent=47 // pred_check
          %p979 = pneg %p978
        $region78: #{tpu_custom_call.1} parent=47 // pred_check_branch
          %981 = sbr.rel (%p979) target = $region80
        $region79: #{tpu_custom_call.1} parent=47 // pred_region
          %p982 = scmp.eq.s32.totalorder %s29, 0
          // Predicated region
          $region81: #{tpu_custom_call.1} parent=79 // pred_check
            %p983 = pneg %p982
          $region82: #{tpu_custom_call.1} parent=79 // pred_check_branch
            %985 = sbr.rel (%p983) target = $region84
          $region83: #{tpu_custom_call.1} parent=79 // pred_region
            %v986 = vld [vmem:[#allocation4] sm:$0x1]
            %v987 = vmul.f32 %v986, 0.125
            %v988 = vld [vmem:[#allocation5] sm:$0x1]
            %v989 = vmul.f32 %v988, 0.125
            %v990 = vmul.f32 %v987, %v987
            %v991 = vsub.f32 %v989, %v990
            %v992 = vmax.f32 %v991, 0.0
            %v993 = vadd.f32 %v992, 1e-05
            %v994 = vrsqrt.pop %v993
            %v995 = vld [vmem:[%s5] sm:$0x1]
            %v996 = vmul.f32 %v995, %v994
            %997 = vst [vmem:[#allocation8] sm:$0x1] %v996
            %v998 = vld [vmem:[#allocation12] sm:$0x1]
            %v999 = vmul.f32 %v987, %v994
            %v1000 = vld [vmem:[%s5] sm:$0x1]
            %v1001 = vmul.f32 %v999, %v1000
            %vm1002 = vcmask 1040384
            %v1003 = vsel %vm1002, %v1001, 0.0
            %1004 = vadd.xlane.f32.xlu0 %v1003
            %v1005 = vpop.xlane.xlu0 %1004
            %v1006 = vsub.f32 %v998, %v1005
            %vm1007 = vcmask 0
            %1008 = vst.msk [vmem:[#allocation9] sm:$0x1] %vm1007, %v1006
          $region84: #{tpu_custom_call.1} parent=79 // pred_fallthru
            _
          %s1009 = scalar_lea.vmem [#allocation11], %s356
          %v1010 = vld [vmem:[%s1009] sm:$0xff]
          %v1011 = vld [vmem:[#allocation8] sm:$0x1]
          %v1013 = vlaneseq
          %v1014 = vshrl.u32 %v1013, 7
          %v1015 = vsub.s32 0, %v1014
          %v1016 = vrot.slane %v1011, %v1015
          %v1018 = vmul.f32 %v1010, %v1016
          %1019 = vadd.xlane.f32.xlu0 %v1018
          %v1020 = vpop.xlane.xlu0 %1019
          %v1021 = vld [vmem:[#allocation9] sm:$0x1]
          %v1023 = vlaneseq
          %v1024 = vshrl.u32 %v1023, 7
          %v1025 = vsub.s32 0, %v1024
          %v1026 = vrot.slane %v1021, %v1025
          %v1028 = vadd.f32 %v1020, %v1026
          %vm1029 = vcmask 7168
          %1030 = vst.msk [vmem:[%s352] sm:$0xff] %vm1029, %v1028
        $region80: #{tpu_custom_call.1} parent=47 // pred_fallthru
          _
        %p1031 = scmp.eq.s32.totalorder %s28, 2
        %s1032 = scalar_select %p1031, %s29, 0
        %p1033 = scmp.lt.s32.totalorder %s1032, 0
        %s1034 = scalar_select %p1033, %s1032, 0
        %s1035 = smul.addr %s1034, 8
        %s1036 = scalar_lea.vmem %s7, %s1035
        // Predicated region
        $region85: #{tpu_custom_call.1} parent=47 // pred_check
          %p1037 = pneg %p214
        $region86: #{tpu_custom_call.1} parent=47 // pred_check_branch
          %1039 = sbr.rel (%p1037) target = $region88
        $region87: #{tpu_custom_call.1} parent=47 // pred_region
          %p1040 = scmp.eq.s32.totalorder %s28, 2
          %s1041 = scalar_select %p1040, %s29, 0
        $region88: #{tpu_custom_call.1} parent=47 // pred_fallthru
          _
      $region48: #{tpu_custom_call.1} parent=5 // pred_fallthru
        _
      %p1042 = scmp.le.s32.totalorder 2, %s19
      // Predicated region
      $region89: #{tpu_custom_call.1} parent=5 // pred_check
        %p1043 = pneg %p1042
      $region90: #{tpu_custom_call.1} parent=5 // pred_check_branch
        %1045 = sbr.rel (%p1043) target = $region92
      $region91: #{tpu_custom_call.1} parent=5 // pred_region
        %s1046 = ssub.s32 %s19, 2
        // Predicated region
        $region93: #{tpu_custom_call.1} parent=91 // pred_check
          %p1047 = pneg %p220
        $region94: #{tpu_custom_call.1} parent=91 // pred_check_branch
          %1049 = sbr.rel (%p1047) target = $region96
        $region95: #{tpu_custom_call.1} parent=91 // pred_region
          %p1050 = scmp.eq.s32.totalorder %s30, 2
          %s1051 = scalar_select %p1050, %s31, 0
          %p1052 = scmp.lt.s32.totalorder %s1051, 0
          %s1053 = scalar_select %p1052, %s1051, 0
          %s1054 = smul.addr %s1053, 8
          %s1055 = scalar_lea.vmem %s7, %s1054
        $region96: #{tpu_custom_call.1} parent=91 // pred_fallthru
          _
      $region92: #{tpu_custom_call.1} parent=5 // pred_fallthru
        _
    $region6: #{tpu_custom_call.1} parent=1 // loop_footer
      %s23 = sadd.s32 1, %s19
    $region7: #{tpu_custom_call.1} parent=1 // loop_footer_branch
      %18 = sbr.rel target = $region3
    $region8: #{tpu_custom_call.1} parent=1 // loop_exit
      _
    %1056 = vsyncpa [#allocation14], 1
    %s1057 = scalar_lea.sflag [#allocation14], 1
    %1058 = vsyncpa %s1057, 1
    %1059 = vsyncpa [#allocation16], 1

</llo_original>
